<compile_context>
chip_gen: v5e
topology: v5e:2x2
jax: 0.10.0
libtpu: 0.0.40
codegen_flags: <defaults>
</compile_context>

<pallas_src>
import jax
import jax.numpy as jnp
from jax.experimental import pallas as pl
from jax.experimental.pallas import tpu as pltpu

RATES = (6, 12, 18)      # output_stride == 16
RMAX = max(RATES)        # single zero-pad amount shared by all dilated branches
RED = 256                # reduction_dim


def _round_up(x, m):
    return (x + m - 1) // m * m


def _fold_bn_into_conv(w_oihw, bn, eps):
    """Fold eval-mode BatchNorm2d into a bias-free conv: returns (scaled_weight, bias)."""
    gamma, beta, mean, var = bn
    scale = gamma / jnp.sqrt(var + eps)                       # (Cout,)
    return w_oihw * scale[:, None, None, None], beta - scale * mean


def _make_kernel(red):
    def aspp_kernel(pooled_ref, lhs_ref, rhs_ref, wimg_ref, bias_ref, o_ref):
        # pooled_ref : (1, Cpad)     f32  per-image global-average-pooled activations
        # lhs_ref    : (TM, Kp)      cdt  packed conv taps for this (image, row tile)
        # rhs_ref    : (Kp, 4*red)   cdt  fused [1x1 | d6 | d12 | d18] weights (BN folded)
        # wimg_ref   : (Cpad, red)   cdt  image-pool 1x1 weight (BN folded)
        # bias_ref   : (1, 5*red)    f32  folded BN biases in output order
        # o_ref      : (TM, 5*red)        lane-dense output rows
        tm = o_ref.shape[0]

        # ---- branch 0: image pooling -> 1x1 conv -> BN -> ReLU -> broadcast ----
        h_img = jnp.dot(pooled_ref[...].astype(wimg_ref.dtype), wimg_ref[...],
                        preferred_element_type=jnp.float32)                 # (1, red)
        h_img = jnp.maximum(h_img + bias_ref[:, 0:red], 0.0)
        o_ref[:, 0:red] = jnp.broadcast_to(h_img, (tm, red)).astype(o_ref.dtype)

        # ---- branches 1..4 fused: single MXU dot over the packed taps ----
        fused = jnp.dot(lhs_ref[...], rhs_ref[...],
                        preferred_element_type=jnp.float32)                 # (TM, 4*red)
        o_ref[:, red:] = jnp.maximum(fused + bias_ref[:, red:], 0.0).astype(o_ref.dtype)

    return aspp_kernel


def aspp_forward(x_nchw, params, *, compute_dtype=jnp.bfloat16,
                 out_dtype=jnp.float32, row_tile=128):
    """x_nchw: (N, Cin, H, W) f32.  Returns (N, 5*reduction_dim, H, W) in `out_dtype`."""
    w_img, bn_img, w_1x1, bn_1x1, w_dils, bn_dils, eps = params
    N, Cin, H, W = x_nchw.shape
    red = w_img.shape[0]
    HW = H * W

    n_taps = 1 + 8 * len(RATES)            # shared center tap + off-center taps per rate
    K = n_taps * Cin
    if K > 4096:
        # TODO(synk): for large in_dim (e.g. 2048) switch to in-kernel row-band halo tiling
        # with a K-reduction grid axis ("arbitrary") instead of wrapper-side tap packing.
        raise NotImplementedError("packed-tap ASPP kernel is gated to small in_dim")
    Kp = _round_up(K, 128)                 # full MXU contraction passes (128-aligned K)
    Cpad = _round_up(Cin, 128)             # lane-dense img-pool operands

    TM = _round_up(min(row_tile, _round_up(HW, 8)), 8)
    HW_pad = _round_up(HW, TM)

    # ---- fold BN into the conv weights (wrapper side; kernel stays pure MXU + bias/ReLU) ----
    wi_f, b_img = _fold_bn_into_conv(w_img, bn_img, eps)
    w1_f, b_1 = _fold_bn_into_conv(w_1x1, bn_1x1, eps)
    wd_f, b_d = [], []
    for w, bn in zip(w_dils, bn_dils):
        wf, bf = _fold_bn_into_conv(w, bn, eps)
        wd_f.append(wf)
        b_d.append(bf)

    def tap_mat(w_oihw, ky, kx):           # (O, I, 3, 3)[:, :, ky, kx] -> (Cin, red)
        return w_oihw[:, :, ky, kx].T

    # ---- fused RHS: rows follow the packed-tap K layout, cols are [1x1 | d6 | d12 | d18] ----
    rhs = jnp.zeros((Kp, 4 * red), jnp.float32)
    center_cols = jnp.concatenate([w1_f[:, :, 0, 0].T] + [tap_mat(w, 1, 1) for w in wd_f], axis=1)
    rhs = rhs.at[0:Cin, :].set(center_cols)
    row = Cin
    for i in range(len(RATES)):
        for t in range(9):
            if t == 4:
                continue
            ky, kx = t // 3, t % 3
            rhs = rhs.at[row:row + Cin, (1 + i) * red:(2 + i) * red].set(tap_mat(wd_f[i], ky, kx))
            row += Cin
    rhs = rhs.astype(compute_dtype)

    wimg_mat = jnp.zeros((Cpad, red), jnp.float32).at[0:Cin, :].set(wi_f[:, :, 0, 0].T)
    wimg_mat = wimg_mat.astype(compute_dtype)
    bias_all = jnp.concatenate([b_img, b_1] + b_d)[None, :].astype(jnp.float32)

    # ---- LHS: pack the 25 taps channel-wise; lane-dense (last dim Kp, a 128 multiple) ----
    x_nhwc = jnp.transpose(x_nchw, (0, 2, 3, 1)).astype(jnp.float32)
    pooled = jnp.mean(x_nhwc, axis=(1, 2))                               # f32 pooling (exact)
    pooled = jnp.pad(pooled, ((0, 0), (0, Cpad - Cin)))[:, None, :]      # (N, 1, Cpad)

    xpad = jnp.pad(x_nhwc, ((0, 0), (RMAX, RMAX), (RMAX, RMAX), (0, 0)))
    taps = [x_nhwc]                                                      # shared center tap
    for r in RATES:
        for t in range(9):
            if t == 4:
                continue
            ky, kx = t // 3, t % 3
            oy = RMAX + (ky - 1) * r
            ox = RMAX + (kx - 1) * r
            taps.append(xpad[:, oy:oy + H, ox:ox + W, :])
    lhs = jnp.concatenate(taps, axis=-1).reshape(N, HW, K)
    lhs = jnp.pad(lhs, ((0, 0), (0, HW_pad - HW), (0, Kp - K))).astype(compute_dtype)

    # ---- explicit VMEM budget: double buffers for every blocked operand + headroom ----
    cb = jnp.dtype(compute_dtype).itemsize
    ob = jnp.dtype(out_dtype).itemsize
    vmem_needed = 2 * (TM * Kp * cb + Kp * 4 * red * cb + Cpad * red * cb
                       + 5 * red * 4 + Cpad * 4 + TM * 5 * red * ob)
    vmem_limit = int(min(64 * 1024 * 1024, 2 * vmem_needed + (8 << 20)))

    kernel = _make_kernel(red)
    grid = (N, HW_pad // TM)

    out_flat = pl.pallas_call(
        kernel,
        out_shape=jax.ShapeDtypeStruct((N, HW_pad, 5 * red), out_dtype),
        grid_spec=pltpu.PrefetchScalarGridSpec(
            num_scalar_prefetch=0,
            grid=grid,
            in_specs=[
                pl.BlockSpec((None, 1, Cpad), lambda n, t: (n, 0, 0)),    # pooled (per image)
                pl.BlockSpec((None, TM, Kp), lambda n, t: (n, t, 0)),     # packed taps (per tile)
                # Constant-index operands (fetched once by the pipeliner).
                # TODO(synk): single-buffer these via pipeline_mode=pl.Buffered(1) to drop the
                # idle second buffer; footprint is small at the gated in_dim so kept default.
                pl.BlockSpec((Kp, 4 * red), lambda n, t: (0, 0)),         # fused conv weights
                pl.BlockSpec((Cpad, red), lambda n, t: (0, 0)),           # img-pool weight
                pl.BlockSpec((1, 5 * red), lambda n, t: (0, 0)),          # folded biases
            ],
            out_specs=pl.BlockSpec((None, TM, 5 * red), lambda n, t: (n, t, 0)),
        ),
        compiler_params=pltpu.CompilerParams(
            dimension_semantics=("parallel", "parallel"),
            vmem_limit_bytes=vmem_limit,
        ),
    )(pooled, lhs, rhs, wimg_mat, bias_all)

    out = out_flat[:, :HW, :].reshape(N, H, W, 5 * red)
    return jnp.transpose(out, (0, 3, 1, 2))


def reference_forward(x, params):
    """Pure-JAX (XLA) reference mirroring the PyTorch eval-mode ASPP forward."""
    w_img, bn_img, w_1x1, bn_1x1, w_dils, bn_dils, eps = params
    N, Cin, H, W = x.shape

    def bn_relu(h, bn):
        gamma, beta, mean, var = bn
        h = (h - mean[None, :, None, None]) / jnp.sqrt(var[None, :, None, None] + eps)
        h = h * gamma[None, :, None, None] + beta[None, :, None, None]
        return jnp.maximum(h, 0.0)

    def conv(inp, w, r=1, k=1):
        pad = 0 if k == 1 else r
        return jax.lax.conv_general_dilated(
            inp, w, window_strides=(1, 1), padding=((pad, pad), (pad, pad)),
            rhs_dilation=(r, r), dimension_numbers=("NCHW", "OIHW", "NCHW"))

    pooled = jnp.mean(x, axis=(2, 3), keepdims=True)                 # AdaptiveAvgPool2d(1)
    img = bn_relu(conv(pooled, w_img), bn_img)                       # (N, red, 1, 1)
    img = jnp.broadcast_to(img, (N, img.shape[1], H, W))             # bilinear up from 1x1 == broadcast

    outs = [img, bn_relu(conv(x, w_1x1), bn_1x1)]
    for w, bn, r in zip(w_dils, bn_dils, RATES):
        outs.append(bn_relu(conv(x, w, r=r, k=3), bn))
    return jnp.concatenate(outs, axis=1)


if __name__ == "__main__":
    # small, module-consistent shapes (in_dim=4, reduction_dim=256, output_stride=16)
    N, Cin, H, W = 2, 4, 16, 16
    eps = 1e-5

    key = jax.random.PRNGKey(0)
    ks = list(jax.random.split(key, 26))
    kit = iter(ks)

    def nrm(shape, s=0.1):
        return s * jax.random.normal(next(kit), shape, jnp.float32)

    def make_bn(c):
        return (1.0 + nrm((c,)),                                                # gamma
                nrm((c,)),                                                       # beta
                nrm((c,)),                                                       # running_mean
                jnp.abs(jax.random.normal(next(kit), (c,), jnp.float32)) + 0.5)  # running_var

    x = jax.random.normal(next(kit), (N, Cin, H, W), jnp.float32)

    w_img = nrm((RED, Cin, 1, 1)); bn_img = make_bn(RED)
    w_1x1 = nrm((RED, Cin, 1, 1)); bn_1x1 = make_bn(RED)
    w_dils = tuple(nrm((RED, Cin, 3, 3)) for _ in RATES)
    bn_dils = tuple(make_bn(RED) for _ in RATES)

    params = (w_img, bn_img, w_1x1, bn_1x1, w_dils, bn_dils, eps)

    fwd = jax.jit(aspp_forward, static_argnames=("compute_dtype", "out_dtype", "row_tile"))

    # f32 compute / f32 output, 2 spatial tiles per image (exercises the (N, tiles) grid)
    out_f32 = jax.block_until_ready(
        fwd(x, params, compute_dtype=jnp.float32, out_dtype=jnp.float32, row_tile=128))
    # bf16 compute / bf16 output (halved writeback), single spatial tile per image
    out_bf16 = jax.block_until_ready(
        fwd(x, params, compute_dtype=jnp.bfloat16, out_dtype=jnp.bfloat16, row_tile=256))

    ref = jax.block_until_ready(reference_forward(x, params))

    assert out_f32.shape == (N, 5 * RED, H, W)
    assert out_bf16.shape == (N, 5 * RED, H, W)
    assert jnp.allclose(out_f32, ref, atol=1e-3, rtol=1e-3), "f32 kernel mismatch vs reference"
    assert jnp.allclose(out_bf16.astype(jnp.float32), ref, atol=5e-2, rtol=5e-2), \
        "bf16 kernel mismatch vs reference"

    print("KERNEL_OK")
</pallas_src>

<mosaic_0001>
module attributes {stable_mosaic.version = 11 : i64} {
  func.func @aspp_kernel(%arg0: i32, %arg1: i32, %arg2: memref<1x1x128xf32, #tpu.memory_space<vmem>>, %arg3: memref<1x128x128xf32, #tpu.memory_space<vmem>>, %arg4: memref<128x1024xf32, #tpu.memory_space<vmem>>, %arg5: memref<128x256xf32, #tpu.memory_space<vmem>>, %arg6: memref<1x1280xf32, #tpu.memory_space<vmem>>, %arg7: memref<1x128x1280xf32, #tpu.memory_space<vmem>>) attributes {dimension_semantics = [#tpu.dimension_semantics<parallel>, #tpu.dimension_semantics<parallel>], iteration_bounds = array<i64: 2, 2>, scalar_prefetch = 0 : i64, scratch_operands = 0 : i64, tpu.core_type = #tpu.core_type<tc>, window_params = [{transform_indices = @transform_0, window_bounds = array<i64: 1, 1, 128>}, {transform_indices = @transform_1, window_bounds = array<i64: 1, 128, 128>}, {pipeline_mode = #tpu.pipeline_mode<synchronous>, transform_indices = @transform_2, window_bounds = array<i64: 128, 1024>}, {pipeline_mode = #tpu.pipeline_mode<synchronous>, transform_indices = @transform_3, window_bounds = array<i64: 128, 256>}, {pipeline_mode = #tpu.pipeline_mode<synchronous>, transform_indices = @transform_4, window_bounds = array<i64: 1, 1280>}, {transform_indices = @transform_5, window_bounds = array<i64: 1, 128, 1280>}]} {
    %c0 = arith.constant 0 : index
    %c0_0 = arith.constant 0 : index
    %c0_1 = arith.constant 0 : index
    %0 = vector.load %arg2[%c0, %c0_0, %c0_1] : memref<1x1x128xf32, #tpu.memory_space<vmem>>, vector<1x1x128xf32>
    %1 = vector.shape_cast %0 : vector<1x1x128xf32> to vector<1x128xf32>
    %c0_2 = arith.constant 0 : index
    %c0_3 = arith.constant 0 : index
    %2 = vector.load %arg5[%c0_2, %c0_3] : memref<128x256xf32, #tpu.memory_space<vmem>>, vector<128x256xf32>
    %cst = arith.constant dense<0.000000e+00> : vector<1x256xf32>
    %3 = tpu.matmul %1, %2, %cst {dimension_numbers = #tpu.dot_dimension_numbers<[1], [0], [0], [1], [0, 0, 1, 1], [], []>} : vector<1x128xf32>, vector<128x256xf32>, vector<1x256xf32> -> vector<1x256xf32>
    %c0_4 = arith.constant 0 : index
    %c0_5 = arith.constant 0 : index
    %4 = vector.load %arg6[%c0_4, %c0_5] : memref<1x1280xf32, #tpu.memory_space<vmem>>, vector<1x256xf32>
    %5 = arith.addf %3, %4 : vector<1x256xf32>
    %cst_6 = arith.constant 0.000000e+00 : f32
    %6 = vector.broadcast %cst_6 : f32 to vector<1x256xf32>
    %7 = arith.maximumf %5, %6 : vector<1x256xf32>
    %8 = vector.shape_cast %7 : vector<1x256xf32> to vector<1x256xf32>
    %9 = vector.broadcast %8 : vector<1x256xf32> to vector<128x256xf32>
    %c0_7 = arith.constant 0 : index
    %c0_8 = arith.constant 0 : index
    %c0_9 = arith.constant 0 : index
    %10 = vector.load %arg7[%c0_7, %c0_8, %c0_9] : memref<1x128x1280xf32, #tpu.memory_space<vmem>>, vector<1x128x256xf32>
    %11 = vector.shape_cast %10 : vector<1x128x256xf32> to vector<128x256xf32>
    %12 = vector.shape_cast %9 : vector<128x256xf32> to vector<1x128x256xf32>
    tpu.vector_store %arg7[%c0_7, %c0_8, %c0_9], %12 {strides = array<i32>} : memref<1x128x1280xf32, #tpu.memory_space<vmem>>, vector<1x128x256xf32>,
    %c0_10 = arith.constant 0 : index
    %c0_11 = arith.constant 0 : index
    %c0_12 = arith.constant 0 : index
    %13 = vector.load %arg3[%c0_10, %c0_11, %c0_12] : memref<1x128x128xf32, #tpu.memory_space<vmem>>, vector<1x128x128xf32>
    %14 = vector.shape_cast %13 : vector<1x128x128xf32> to vector<128x128xf32>
    %c0_13 = arith.constant 0 : index
    %c0_14 = arith.constant 0 : index
    %15 = vector.load %arg4[%c0_13, %c0_14] : memref<128x1024xf32, #tpu.memory_space<vmem>>, vector<128x1024xf32>
    %cst_15 = arith.constant dense<0.000000e+00> : vector<128x1024xf32>
    %16 = tpu.matmul %14, %15, %cst_15 {dimension_numbers = #tpu.dot_dimension_numbers<[1], [0], [0], [1], [0, 0, 1, 1], [], []>} : vector<128x128xf32>, vector<128x1024xf32>, vector<128x1024xf32> -> vector<128x1024xf32>
    %c0_16 = arith.constant 0 : index
    %c256 = arith.constant 256 : index
    %17 = vector.load %arg6[%c0_16, %c256] : memref<1x1280xf32, #tpu.memory_space<vmem>>, vector<1x1024xf32>
    %18 = vector.broadcast %17 : vector<1x1024xf32> to vector<128x1024xf32>
    %19 = arith.addf %16, %18 : vector<128x1024xf32>
    %cst_17 = arith.constant 0.000000e+00 : f32
    %20 = vector.broadcast %cst_17 : f32 to vector<128x1024xf32>
    %21 = arith.maximumf %19, %20 : vector<128x1024xf32>
    %c0_18 = arith.constant 0 : index
    %c0_19 = arith.constant 0 : index
    %c256_20 = arith.constant 256 : index
    %22 = vector.load %arg7[%c0_18, %c0_19, %c256_20] : memref<1x128x1280xf32, #tpu.memory_space<vmem>>, vector<1x128x1024xf32>
    %23 = vector.shape_cast %22 : vector<1x128x1024xf32> to vector<128x1024xf32>
    %24 = vector.shape_cast %21 : vector<128x1024xf32> to vector<1x128x1024xf32>
    tpu.vector_store %arg7[%c0_18, %c0_19, %c256_20], %24 {strides = array<i32>} : memref<1x128x1280xf32, #tpu.memory_space<vmem>>, vector<1x128x1024xf32>,
    return
  }
  func.func @transform_0(%arg0: i32, %arg1: i32) -> (i32, i32, i32) {
    %c0_i32 = arith.constant 0 : i32
    %c0_i32_0 = arith.constant 0 : i32
    %c0_i32_1 = arith.constant 0 : i32
    return %arg0, %c0_i32, %c0_i32_0 : i32, i32, i32
  }
  func.func @transform_1(%arg0: i32, %arg1: i32) -> (i32, i32, i32) {
    %c0_i32 = arith.constant 0 : i32
    %c0_i32_0 = arith.constant 0 : i32
    return %arg0, %arg1, %c0_i32 : i32, i32, i32
  }
  func.func @transform_2(%arg0: i32, %arg1: i32) -> (i32, i32) {
    %c0_i32 = arith.constant 0 : i32
    %c0_i32_0 = arith.constant 0 : i32
    %c0_i32_1 = arith.constant 0 : i32
    return %c0_i32, %c0_i32_0 : i32, i32
  }
  func.func @transform_3(%arg0: i32, %arg1: i32) -> (i32, i32) {
    %c0_i32 = arith.constant 0 : i32
    %c0_i32_0 = arith.constant 0 : i32
    %c0_i32_1 = arith.constant 0 : i32
    return %c0_i32, %c0_i32_0 : i32, i32
  }
  func.func @transform_4(%arg0: i32, %arg1: i32) -> (i32, i32) {
    %c0_i32 = arith.constant 0 : i32
    %c0_i32_0 = arith.constant 0 : i32
    %c0_i32_1 = arith.constant 0 : i32
    return %c0_i32, %c0_i32_0 : i32, i32
  }
  func.func @transform_5(%arg0: i32, %arg1: i32) -> (i32, i32, i32) {
    %c0_i32 = arith.constant 0 : i32
    %c0_i32_0 = arith.constant 0 : i32
    return %arg0, %arg1, %c0_i32 : i32, i32, i32
  }
}

</mosaic_0001>

<llo_original>
// kernel: custom-call
$region0: #{custom-call}
  %s0 = inlined_call_operand.vmem [shape: f32[1280], index: 0, kind: output, shape index: {}]

// kernel: aspp_forward.1
$region0: #{aspp_forward.1}
  #allocation0 [shape = 'u32[]', space=smem, size = 0x4, offset = 0x4, fixed_abs, tag = 'smem constant byte address 0x4 - core index']
  #allocation1 [shape = 'u32[72,128]{1,0:T(1,128)}', space=vmem, size = 0x9000, scoped, tag = 'internal scratch']
  %s0 = inlined_call_operand.vmem [shape: f32[2,1,128], index: 0, kind: input, shape index: {}]
  %s1 = inlined_call_operand.vmem [shape: f32[2,256,128], index: 1, kind: input, shape index: {}]
  %s2 = inlined_call_operand.vmem [shape: f32[128,1024], index: 2, kind: input, shape index: {}]
  %s3 = inlined_call_operand.vmem [shape: f32[128,256], index: 3, kind: input, shape index: {}]
  %s4 = inlined_call_operand.vmem [shape: f32[1,1280], index: 4, kind: input, shape index: {}]
  %s5 = inlined_call_operand.hbm [shape: f32[2,256,1280], index: 5, kind: output, shape index: {}]
  %s6 = sld [smem:[#allocation0]]
  $region53: #{aspp_forward.1} parent=0
    _
  %s8 = ssub.s32 1, %s6
  %s9 = scalar_select 0, %s8, %s6
  $region1: #{aspp_forward.1} parent=0
    #allocation2 [shape = 'u8[1310720]{0}', space=vmem, size = 0x140000, scoped, tag = 'output window, operand 0']
    #allocation3 [shape = 's32[2]{0}', space=sflag, size = 0x8, scoped, tag = 'scoped memory for aspp_forward.1']
    %10 = vsyncpa [#allocation3], 0
    %s11 = scalar_lea.sflag [#allocation3], 1
    %12 = vsyncpa %s11, 0
    loop: start=0, step=1, limit=6
    $region2: #{aspp_forward.1} parent=1 // loop_pre_header
      _
    $region3: #{aspp_forward.1} parent=1 // loop_header
      %s14 = sphi 0, %s18
      %p15 = scmp.ge.s32.totalorder %s14, 6
      %s21 = sphi 0, %s33
      %s22 = sphi 0, %s29
      %s23 = sphi 0, %s21
      %s24 = sphi 0, %s22
      %s25 = sphi 0, %s23
      %s26 = sphi 0, %s24
      %s36 = sphi 0, %s38
      %s39 = sphi 0, %s36
      %s40 = sphi 0, %s39
      %s56 = sphi 0, %s40
      %s64 = sphi 0, %s66
      %s67 = sphi 0, %s64
      %s68 = sphi 0, %s67
      %s84 = sphi 0, %s68
      %s88 = sphi 0, %s88
      %s90 = sphi 0, %s88
      %s91 = sphi 0, %s90
      %s105 = sphi 0, %s91
      %s109 = sphi 0, %s109
      %s111 = sphi 0, %s109
      %s112 = sphi 0, %s111
      %s126 = sphi 0, %s112
      %s130 = sphi 0, %s130
      %s132 = sphi 0, %s130
      %s133 = sphi 0, %s132
      %s147 = sphi 0, %s133
      %s155 = sphi 0, %s157
      %s158 = sphi 0, %s155
      %s159 = sphi 0, %s158
      %s175 = sphi 0, %s159
    $region4: #{aspp_forward.1} parent=1 // loop_header_branch
      %17 = sbr.rel (%p15) target = $region8
    $region5: #{aspp_forward.1} parent=1 // loop_body
      %s19 = ssub.s32 %s14, 1
      %s20 = ssub.s32 %s14, 2
      %s27 = sadd.s32 1, %s22
      %p28 = scmp.ge.s32.totalorder %s27, 2
      %s29 = scalar_select %p28, 0, %s27
      %s30 = sadd.s32 1, %s21
      %s31 = scalar_select %p28, %s30, %s21
      %p32 = scmp.ge.s32.totalorder %s31, 2
      %s33 = scalar_select %p32, 0, %s31
      %s34 = ssub.s32 %s21, %s33
      %p35 = scmp.eq.s32.totalorder %s34, 0
      %s37 = sadd.s32 %s36, 1
      %s38 = scalar_select %p35, %s36, %s37
      %p41 = pneg %p35
      %p42 = scmp.eq.s32.totalorder %s14, 3
      %p43 = por %p41, %p42
      %p44 = scmp.ne.s32.totalorder %s36, %s39
      %p45 = scmp.eq.s32.totalorder %s14, 0
      %p46 = por %p44, %p45
      %p47 = scmp.ne.s32.totalorder %s36, %s39
      %p48 = scmp.eq.s32.totalorder %s19, 3
      %p49 = por %p47, %p48
      %p50 = scmp.ne.s32.totalorder %s39, %s40
      %p51 = scmp.eq.s32.totalorder %s19, 0
      %p52 = por %p50, %p51
      %p53 = scmp.ne.s32.totalorder %s39, %s40
      %p54 = scmp.eq.s32.totalorder %s20, 3
      %p55 = por %p53, %p54
      %p57 = scmp.ne.s32.totalorder %s40, %s56
      %p58 = scmp.eq.s32.totalorder %s20, 0
      %p59 = por %p57, %p58
      %s60 = ssub.s32 %s21, %s33
      %s61 = ssub.s32 %s22, %s29
      %s62 = sor.u32 %s60, %s61
      %p63 = scmp.eq.s32.totalorder %s62, 0
      %s65 = sadd.s32 %s64, 1
      %s66 = scalar_select %p63, %s64, %s65
      %p69 = pneg %p63
      %p70 = scmp.eq.s32.totalorder %s14, 3
      %p71 = por %p69, %p70
      %p72 = scmp.ne.s32.totalorder %s64, %s67
      %p73 = scmp.eq.s32.totalorder %s14, 0
      %p74 = por %p72, %p73
      %p75 = scmp.ne.s32.totalorder %s64, %s67
      %p76 = scmp.eq.s32.totalorder %s19, 3
      %p77 = por %p75, %p76
      %p78 = scmp.ne.s32.totalorder %s67, %s68
      %p79 = scmp.eq.s32.totalorder %s19, 0
      %p80 = por %p78, %p79
      %p81 = scmp.ne.s32.totalorder %s67, %s68
      %p82 = scmp.eq.s32.totalorder %s20, 3
      %p83 = por %p81, %p82
      %p85 = scmp.ne.s32.totalorder %s68, %s84
      %p86 = scmp.eq.s32.totalorder %s20, 0
      %p87 = por %p85, %p86
      %s89 = sadd.s32 %s88, 1
      %p92 = scmp.eq.s32.totalorder %s14, 3
      %p93 = scmp.ne.s32.totalorder %s88, %s90
      %p94 = scmp.eq.s32.totalorder %s14, 0
      %p95 = por %p93, %p94
      %p96 = scmp.ne.s32.totalorder %s88, %s90
      %p97 = scmp.eq.s32.totalorder %s19, 3
      %p98 = por %p96, %p97
      %p99 = scmp.ne.s32.totalorder %s90, %s91
      %p100 = scmp.eq.s32.totalorder %s19, 0
      %p101 = por %p99, %p100
      %p102 = scmp.ne.s32.totalorder %s90, %s91
      %p103 = scmp.eq.s32.totalorder %s20, 3
      %p104 = por %p102, %p103
      %p106 = scmp.ne.s32.totalorder %s91, %s105
      %p107 = scmp.eq.s32.totalorder %s20, 0
      %p108 = por %p106, %p107
      %s110 = sadd.s32 %s109, 1
      %p113 = scmp.eq.s32.totalorder %s14, 3
      %p114 = scmp.ne.s32.totalorder %s109, %s111
      %p115 = scmp.eq.s32.totalorder %s14, 0
      %p116 = por %p114, %p115
      %p117 = scmp.ne.s32.totalorder %s109, %s111
      %p118 = scmp.eq.s32.totalorder %s19, 3
      %p119 = por %p117, %p118
      %p120 = scmp.ne.s32.totalorder %s111, %s112
      %p121 = scmp.eq.s32.totalorder %s19, 0
      %p122 = por %p120, %p121
      %p123 = scmp.ne.s32.totalorder %s111, %s112
      %p124 = scmp.eq.s32.totalorder %s20, 3
      %p125 = por %p123, %p124
      %p127 = scmp.ne.s32.totalorder %s112, %s126
      %p128 = scmp.eq.s32.totalorder %s20, 0
      %p129 = por %p127, %p128
      %s131 = sadd.s32 %s130, 1
      %p134 = scmp.eq.s32.totalorder %s14, 3
      %p135 = scmp.ne.s32.totalorder %s130, %s132
      %p136 = scmp.eq.s32.totalorder %s14, 0
      %p137 = por %p135, %p136
      %p138 = scmp.ne.s32.totalorder %s130, %s132
      %p139 = scmp.eq.s32.totalorder %s19, 3
      %p140 = por %p138, %p139
      %p141 = scmp.ne.s32.totalorder %s132, %s133
      %p142 = scmp.eq.s32.totalorder %s19, 0
      %p143 = por %p141, %p142
      %p144 = scmp.ne.s32.totalorder %s132, %s133
      %p145 = scmp.eq.s32.totalorder %s20, 3
      %p146 = por %p144, %p145
      %p148 = scmp.ne.s32.totalorder %s133, %s147
      %p149 = scmp.eq.s32.totalorder %s20, 0
      %p150 = por %p148, %p149
      %s151 = ssub.s32 %s21, %s33
      %s152 = ssub.s32 %s22, %s29
      %s153 = sor.u32 %s151, %s152
      %p154 = scmp.eq.s32.totalorder %s153, 0
      %s156 = sadd.s32 %s155, 1
      %s157 = scalar_select %p154, %s155, %s156
      %p160 = pneg %p154
      %p161 = scmp.eq.s32.totalorder %s14, 3
      %p162 = por %p160, %p161
      %p163 = scmp.ne.s32.totalorder %s155, %s158
      %p164 = scmp.eq.s32.totalorder %s14, 0
      %p165 = por %p163, %p164
      %p166 = scmp.ne.s32.totalorder %s155, %s158
      %p167 = scmp.eq.s32.totalorder %s19, 3
      %p168 = por %p166, %p167
      %p169 = scmp.ne.s32.totalorder %s158, %s159
      %p170 = scmp.eq.s32.totalorder %s19, 0
      %p171 = por %p169, %p170
      %p172 = scmp.ne.s32.totalorder %s158, %s159
      %p173 = scmp.eq.s32.totalorder %s20, 3
      %p174 = por %p172, %p173
      %p176 = scmp.ne.s32.totalorder %s159, %s175
      %p177 = scmp.eq.s32.totalorder %s20, 0
      %p178 = por %p176, %p177
      %p179 = scmp.le.s32.totalorder 1, %s14
      %p180 = scmp.lt.s32.totalorder %s14, 5
      %p181 = pnand %p179, %p180
      %p182 = pneg %p181
      // Predicated region
      $region9: #{aspp_forward.1} parent=5 // pred_check
        _
      $region10: #{aspp_forward.1} parent=5 // pred_check_branch
        %184 = sbr.rel (%p181) target = $region12
      $region11: #{aspp_forward.1} parent=5 // pred_region
        %s185 = ssub.s32 %s14, 1
        // Predicated region
        $region13: #{aspp_forward.1} parent=11 // pred_check
          %p186 = pneg %p101
        $region14: #{aspp_forward.1} parent=11 // pred_check_branch
          %188 = sbr.rel (%p186) target = $region16
        $region15: #{aspp_forward.1} parent=11 // pred_region
          _
        $region16: #{aspp_forward.1} parent=11 // pred_fallthru
          _
        // Predicated region
        $region17: #{aspp_forward.1} parent=11 // pred_check
          %p189 = pneg %p122
        $region18: #{aspp_forward.1} parent=11 // pred_check_branch
          %191 = sbr.rel (%p189) target = $region20
        $region19: #{aspp_forward.1} parent=11 // pred_region
          _
        $region20: #{aspp_forward.1} parent=11 // pred_fallthru
          _
        // Predicated region
        $region21: #{aspp_forward.1} parent=11 // pred_check
          %p192 = pneg %p143
        $region22: #{aspp_forward.1} parent=11 // pred_check_branch
          %194 = sbr.rel (%p192) target = $region24
        $region23: #{aspp_forward.1} parent=11 // pred_region
          _
        $region24: #{aspp_forward.1} parent=11 // pred_fallthru
          _
      $region12: #{aspp_forward.1} parent=5 // pred_fallthru
        _
      %p195 = scmp.lt.s32.totalorder %s14, 4
      // Predicated region
      $region25: #{aspp_forward.1} parent=5 // pred_check
        %p196 = pneg %p195
      $region26: #{aspp_forward.1} parent=5 // pred_check_branch
        %198 = sbr.rel (%p196) target = $region28
      $region27: #{aspp_forward.1} parent=5 // pred_region
        // Predicated region
        $region29: #{aspp_forward.1} parent=27 // pred_check
          %p199 = pneg %p46
        $region30: #{aspp_forward.1} parent=27 // pred_check_branch
          %201 = sbr.rel (%p199) target = $region32
        $region31: #{aspp_forward.1} parent=27 // pred_region
          %p202 = scmp.lt.s32.totalorder %s21, 1
          %s203 = scalar_select %p202, %s21, 1
          %s204 = scalar_lea.vmem %s0, %s203
        $region32: #{aspp_forward.1} parent=27 // pred_fallthru
          _
        // Predicated region
        $region33: #{aspp_forward.1} parent=27 // pred_check
          %p205 = pneg %p74
        $region34: #{aspp_forward.1} parent=27 // pred_check_branch
          %207 = sbr.rel (%p205) target = $region36
        $region35: #{aspp_forward.1} parent=27 // pred_region
          %s208 = smul.u32 16, %s22
          %p209 = scmp.lt.s32.totalorder %s21, 1
          %s210 = scalar_select %p209, %s21, 1
          %p211 = scmp.lt.s32.totalorder %s208, 31
          %s212 = scalar_select %p211, %s208, 31
          %s213 = smul.addr %s210, 32
          %s214 = sadd.s32 %s212, %s213
          %s215 = smul.addr %s214, 8
          %s216 = scalar_lea.vmem %s1, %s215
          %s217 = smul.u32 16, %s22
        $region36: #{aspp_forward.1} parent=27 // pred_fallthru
          _
      $region28: #{aspp_forward.1} parent=5 // pred_fallthru
        _
      %p218 = scmp.le.s32.totalorder 1, %s14
      %p219 = scmp.lt.s32.totalorder %s14, 5
      %p220 = pnand %p218, %p219
      %p221 = pneg %p220
      // Predicated region
      $region37: #{aspp_forward.1} parent=5 // pred_check
        _
      $region38: #{aspp_forward.1} parent=5 // pred_check_branch
        %223 = sbr.rel (%p220) target = $region40
      $region39: #{aspp_forward.1} parent=5 // pred_region
        %s224 = ssub.s32 %s14, 1
        %p225 = scmp.lt.s32.totalorder %s23, 1
        %s226 = scalar_select %p225, %s23, 1
        %s227 = scalar_lea.vmem %s0, %s226
        %p228 = pneg %p52
        %p229 = pneg %p49
        %s230 = smul.u32 16, %s24
        %p231 = scmp.lt.s32.totalorder %s23, 1
        %s232 = scalar_select %p231, %s23, 1
        %p233 = scmp.lt.s32.totalorder %s230, 31
        %s234 = scalar_select %p233, %s230, 31
        %s235 = smul.addr %s232, 32
        %s236 = sadd.s32 %s234, %s235
        %s237 = smul.addr %s236, 8
        %s238 = scalar_lea.vmem %s1, %s237
        %p239 = pneg %p80
        %p240 = pneg %p77
        %p241 = pneg %p101
        %p242 = pneg %p98
        %p243 = pneg %p122
        %p244 = pneg %p119
        %p245 = pneg %p143
        %p246 = pneg %p140
        %p247 = pneg %p171
        %p248 = pneg %p168
        %s249 = sand.u32 %s158, 1
        %s250 = scalar_lea.sflag [#allocation3], %s249
        %s251 = sand.u32 %s158, 1
        %s252 = smul.addr %s251, 1280
        %s253 = scalar_lea.vmem [#allocation2], %s252
        %p254 = scmp.lt.s32.totalorder %s23, 1
        %s255 = scalar_select %p254, %s23, 1
        %s256 = scalar_lea.vmem %s0, %s255
        %s257 = smul.u32 16, %s24
        %p258 = scmp.lt.s32.totalorder %s23, 1
        %s259 = scalar_select %p258, %s23, 1
        %p260 = scmp.lt.s32.totalorder %s257, 31
        %s261 = scalar_select %p260, %s257, 31
        %s262 = smul.addr %s259, 32
        %s263 = sadd.s32 %s261, %s262
        %s264 = smul.addr %s263, 8
        %s265 = scalar_lea.vmem %s1, %s264
        %s266 = smul.u32 16, %s24
        %s267 = smul.u32 16, %s24
        %v268 = vld [vmem:[%s256] sm:$0x1]
        %v269 = vld [vmem:[%s3] sm:$0xff]
        %v270 = vld [vmem:[%s3 + $0x8] sm:$0xff]
        %v271 = vld [vmem:[%s3 + $0x10] sm:$0xff]
        %v272 = vld [vmem:[%s3 + $0x18] sm:$0xff]
        %v273 = vld [vmem:[%s3 + $0x20] sm:$0xff]
        %v274 = vld [vmem:[%s3 + $0x28] sm:$0xff]
        %v275 = vld [vmem:[%s3 + $0x30] sm:$0xff]
        %v276 = vld [vmem:[%s3 + $0x38] sm:$0xff]
        %v277 = vld [vmem:[%s3 + $0x40] sm:$0xff]
        %v278 = vld [vmem:[%s3 + $0x48] sm:$0xff]
        %v279 = vld [vmem:[%s3 + $0x50] sm:$0xff]
        %v280 = vld [vmem:[%s3 + $0x58] sm:$0xff]
        %v281 = vld [vmem:[%s3 + $0x60] sm:$0xff]
        %v282 = vld [vmem:[%s3 + $0x68] sm:$0xff]
        %v283 = vld [vmem:[%s3 + $0x70] sm:$0xff]
        %v284 = vld [vmem:[%s3 + $0x78] sm:$0xff]
        %v285 = vld [vmem:[%s3 + $0x80] sm:$0xff]
        %v286 = vld [vmem:[%s3 + $0x88] sm:$0xff]
        %v287 = vld [vmem:[%s3 + $0x90] sm:$0xff]
        %v288 = vld [vmem:[%s3 + $0x98] sm:$0xff]
        %v289 = vld [vmem:[%s3 + $0xa0] sm:$0xff]
        %v290 = vld [vmem:[%s3 + $0xa8] sm:$0xff]
        %v291 = vld [vmem:[%s3 + $0xb0] sm:$0xff]
        %v292 = vld [vmem:[%s3 + $0xb8] sm:$0xff]
        %v293 = vld [vmem:[%s3 + $0xc0] sm:$0xff]
        %v294 = vld [vmem:[%s3 + $0xc8] sm:$0xff]
        %v295 = vld [vmem:[%s3 + $0xd0] sm:$0xff]
        %v296 = vld [vmem:[%s3 + $0xd8] sm:$0xff]
        %v297 = vld [vmem:[%s3 + $0xe0] sm:$0xff]
        %v298 = vld [vmem:[%s3 + $0xe8] sm:$0xff]
        %v299 = vld [vmem:[%s3 + $0xf0] sm:$0xff]
        %v300 = vld [vmem:[%s3 + $0xf8] sm:$0xff]
        %v301 = vld [vmem:[%s4] sm:$0x3]
        %v303 = vperm.slane %v301, 0
        %v304 = vperm.slane %v301, 1
        %307 = vmatpush.msra.mxu0 %v299
        %308 = vmatpush.msra.mxu0 %v297
        %309 = vmatpush.msra.mxu0 %v295
        %310 = vmatpush.msra.mxu0 %v293
        %311 = vmatpush.msra.mxu0 %v291
        %312 = vmatpush.msra.mxu0 %v289
        %313 = vmatpush.msra.mxu0 %v287
        %314 = vmatpush.msra.mxu0 %v285
        %315 = vmatpush.msra.mxu0 %v283
        %316 = vmatpush.msra.mxu0 %v281
        %317 = vmatpush.msra.mxu0 %v279
        %318 = vmatpush.msra.mxu0 %v277
        %319 = vmatpush.msra.mxu0 %v275
        %320 = vmatpush.msra.mxu0 %v273
        %321 = vmatpush.msra.mxu0 %v271
        %322 = vmatpush.msra.mxu0 %v269
        %323 = vmatmul.f32.gmra.mxu0 %v268
        %v324 = vpop.f32.mrf.mxu0
        %v325 = vadd.f32 %v303, %v324
        %326 = vdwg.mxu0
        %327 = vmatpush.msra.mxu0 %v300
        %328 = vmatpush.msra.mxu0 %v298
        %329 = vmatpush.msra.mxu0 %v296
        %330 = vmatpush.msra.mxu0 %v294
        %331 = vmatpush.msra.mxu0 %v292
        %332 = vmatpush.msra.mxu0 %v290
        %333 = vmatpush.msra.mxu0 %v288
        %334 = vmatpush.msra.mxu0 %v286
        %335 = vmatpush.msra.mxu0 %v284
        %336 = vmatpush.msra.mxu0 %v282
        %337 = vmatpush.msra.mxu0 %v280
        %338 = vmatpush.msra.mxu0 %v278
        %339 = vmatpush.msra.mxu0 %v276
        %340 = vmatpush.msra.mxu0 %v274
        %341 = vmatpush.msra.mxu0 %v272
        %342 = vmatpush.msra.mxu0 %v270
        %343 = vmatmul.f32.gmra.mxu0 %v268
        %v344 = vpop.f32.mrf.mxu0
        %v345 = vadd.f32 %v304, %v344
        %346 = vdwg.mxu0
        %v347 = vmax.f32 %v325, 0.0
        %v348 = vmax.f32 %v345, 0.0
        %v349 = vperm.slane %v347, 0
        %v350 = vperm.slane %v348, 0
        %351 = vst [vmem:[%s253] sm:$0xff] %v349
        %352 = vst [vmem:[%s253 + $0x8] sm:$0xff] %v350
        %353 = vst [vmem:[%s253 + $0x50] sm:$0xff] %v349
        %354 = vst [vmem:[%s253 + $0x58] sm:$0xff] %v350
        %355 = vst [vmem:[%s253 + $0xa0] sm:$0xff] %v349
        %356 = vst [vmem:[%s253 + $0xa8] sm:$0xff] %v350
        %357 = vst [vmem:[%s253 + $0xf0] sm:$0xff] %v349
        %358 = vst [vmem:[%s253 + $0xf8] sm:$0xff] %v350
        %359 = vst [vmem:[%s253 + $0x140] sm:$0xff] %v349
        %360 = vst [vmem:[%s253 + $0x148] sm:$0xff] %v350
        %361 = vst [vmem:[%s253 + $0x190] sm:$0xff] %v349
        %362 = vst [vmem:[%s253 + $0x198] sm:$0xff] %v350
        %363 = vst [vmem:[%s253 + $0x1e0] sm:$0xff] %v349
        %364 = vst [vmem:[%s253 + $0x1e8] sm:$0xff] %v350
        %365 = vst [vmem:[%s253 + $0x230] sm:$0xff] %v349
        %366 = vst [vmem:[%s253 + $0x238] sm:$0xff] %v350
        %367 = vst [vmem:[%s253 + $0x280] sm:$0xff] %v349
        %368 = vst [vmem:[%s253 + $0x288] sm:$0xff] %v350
        %369 = vst [vmem:[%s253 + $0x2d0] sm:$0xff] %v349
        %370 = vst [vmem:[%s253 + $0x2d8] sm:$0xff] %v350
        %371 = vst [vmem:[%s253 + $0x320] sm:$0xff] %v349
        %372 = vst [vmem:[%s253 + $0x328] sm:$0xff] %v350
        %373 = vst [vmem:[%s253 + $0x370] sm:$0xff] %v349
        %374 = vst [vmem:[%s253 + $0x378] sm:$0xff] %v350
        %375 = vst [vmem:[%s253 + $0x3c0] sm:$0xff] %v349
        %376 = vst [vmem:[%s253 + $0x3c8] sm:$0xff] %v350
        %377 = vst [vmem:[%s253 + $0x410] sm:$0xff] %v349
        %378 = vst [vmem:[%s253 + $0x418] sm:$0xff] %v350
        %379 = vst [vmem:[%s253 + $0x460] sm:$0xff] %v349
        %380 = vst [vmem:[%s253 + $0x468] sm:$0xff] %v350
        %381 = vst [vmem:[%s253 + $0x4b0] sm:$0xff] %v349
        %382 = vst [vmem:[%s253 + $0x4b8] sm:$0xff] %v350
        %v383 = vld [vmem:[%s265] sm:$0xff]
        %v384 = vld [vmem:[%s265 + $0x8] sm:$0xff]
        %v385 = vld [vmem:[%s265 + $0x10] sm:$0xff]
        %v386 = vld [vmem:[%s265 + $0x18] sm:$0xff]
        %v387 = vld [vmem:[%s265 + $0x20] sm:$0xff]
        %v388 = vld [vmem:[%s265 + $0x28] sm:$0xff]
        %v389 = vld [vmem:[%s265 + $0x30] sm:$0xff]
        %v390 = vld [vmem:[%s265 + $0x38] sm:$0xff]
        %v391 = vld [vmem:[%s265 + $0x40] sm:$0xff]
        %v392 = vld [vmem:[%s265 + $0x48] sm:$0xff]
        %v393 = vld [vmem:[%s265 + $0x50] sm:$0xff]
        %v394 = vld [vmem:[%s265 + $0x58] sm:$0xff]
        %v395 = vld [vmem:[%s265 + $0x60] sm:$0xff]
        %v396 = vld [vmem:[%s265 + $0x68] sm:$0xff]
        %v397 = vld [vmem:[%s265 + $0x70] sm:$0xff]
        %v398 = vld [vmem:[%s265 + $0x78] sm:$0xff]
        %v399 = vld [vmem:[%s2] sm:$0xff]
        %v400 = vld [vmem:[%s2 + $0x8] sm:$0xff]
        %v401 = vld [vmem:[%s2 + $0x10] sm:$0xff]
        %v402 = vld [vmem:[%s2 + $0x18] sm:$0xff]
        %v403 = vld [vmem:[%s2 + $0x20] sm:$0xff]
        %v404 = vld [vmem:[%s2 + $0x28] sm:$0xff]
        %v405 = vld [vmem:[%s2 + $0x30] sm:$0xff]
        %v406 = vld [vmem:[%s2 + $0x38] sm:$0xff]
        %v407 = vld [vmem:[%s2 + $0x40] sm:$0xff]
        %v408 = vld [vmem:[%s2 + $0x48] sm:$0xff]
        %v409 = vld [vmem:[%s2 + $0x50] sm:$0xff]
        %v410 = vld [vmem:[%s2 + $0x58] sm:$0xff]
        %v411 = vld [vmem:[%s2 + $0x60] sm:$0xff]
        %v412 = vld [vmem:[%s2 + $0x68] sm:$0xff]
        %v413 = vld [vmem:[%s2 + $0x70] sm:$0xff]
        %v414 = vld [vmem:[%s2 + $0x78] sm:$0xff]
        %v415 = vld [vmem:[%s2 + $0x80] sm:$0xff]
        %v416 = vld [vmem:[%s2 + $0x88] sm:$0xff]
        %v417 = vld [vmem:[%s2 + $0x90] sm:$0xff]
        %v418 = vld [vmem:[%s2 + $0x98] sm:$0xff]
        %v419 = vld [vmem:[%s2 + $0xa0] sm:$0xff]
        %v420 = vld [vmem:[%s2 + $0xa8] sm:$0xff]
        %v421 = vld [vmem:[%s2 + $0xb0] sm:$0xff]
        %v422 = vld [vmem:[%s2 + $0xb8] sm:$0xff]
        %v423 = vld [vmem:[%s2 + $0xc0] sm:$0xff]
        %v424 = vld [vmem:[%s2 + $0xc8] sm:$0xff]
        %v425 = vld [vmem:[%s2 + $0xd0] sm:$0xff]
        %v426 = vld [vmem:[%s2 + $0xd8] sm:$0xff]
        %v427 = vld [vmem:[%s2 + $0xe0] sm:$0xff]
        %v428 = vld [vmem:[%s2 + $0xe8] sm:$0xff]
        %v429 = vld [vmem:[%s2 + $0xf0] sm:$0xff]
        %v430 = vld [vmem:[%s2 + $0xf8] sm:$0xff]
        %v431 = vld [vmem:[%s2 + $0x100] sm:$0xff]
        %v432 = vld [vmem:[%s2 + $0x108] sm:$0xff]
        %v433 = vld [vmem:[%s2 + $0x110] sm:$0xff]
        %v434 = vld [vmem:[%s2 + $0x118] sm:$0xff]
        %v435 = vld [vmem:[%s2 + $0x120] sm:$0xff]
        %v436 = vld [vmem:[%s2 + $0x128] sm:$0xff]
        %v437 = vld [vmem:[%s2 + $0x130] sm:$0xff]
        %v438 = vld [vmem:[%s2 + $0x138] sm:$0xff]
        %v439 = vld [vmem:[%s2 + $0x140] sm:$0xff]
        %v440 = vld [vmem:[%s2 + $0x148] sm:$0xff]
        %v441 = vld [vmem:[%s2 + $0x150] sm:$0xff]
        %v442 = vld [vmem:[%s2 + $0x158] sm:$0xff]
        %v443 = vld [vmem:[%s2 + $0x160] sm:$0xff]
        %v444 = vld [vmem:[%s2 + $0x168] sm:$0xff]
        %v445 = vld [vmem:[%s2 + $0x170] sm:$0xff]
        %v446 = vld [vmem:[%s2 + $0x178] sm:$0xff]
        %v447 = vld [vmem:[%s2 + $0x180] sm:$0xff]
        %v448 = vld [vmem:[%s2 + $0x188] sm:$0xff]
        %v449 = vld [vmem:[%s2 + $0x190] sm:$0xff]
        %v450 = vld [vmem:[%s2 + $0x198] sm:$0xff]
        %v451 = vld [vmem:[%s2 + $0x1a0] sm:$0xff]
        %v452 = vld [vmem:[%s2 + $0x1a8] sm:$0xff]
        %v453 = vld [vmem:[%s2 + $0x1b0] sm:$0xff]
        %v454 = vld [vmem:[%s2 + $0x1b8] sm:$0xff]
        %v455 = vld [vmem:[%s2 + $0x1c0] sm:$0xff]
        %v456 = vld [vmem:[%s2 + $0x1c8] sm:$0xff]
        %v457 = vld [vmem:[%s2 + $0x1d0] sm:$0xff]
        %v458 = vld [vmem:[%s2 + $0x1d8] sm:$0xff]
        %v459 = vld [vmem:[%s2 + $0x1e0] sm:$0xff]
        %v460 = vld [vmem:[%s2 + $0x1e8] sm:$0xff]
        %v461 = vld [vmem:[%s2 + $0x1f0] sm:$0xff]
        %v462 = vld [vmem:[%s2 + $0x1f8] sm:$0xff]
        %v463 = vld [vmem:[%s2 + $0x200] sm:$0xff]
        %v464 = vld [vmem:[%s2 + $0x208] sm:$0xff]
        %v465 = vld [vmem:[%s2 + $0x210] sm:$0xff]
        %v466 = vld [vmem:[%s2 + $0x218] sm:$0xff]
        %v467 = vld [vmem:[%s2 + $0x220] sm:$0xff]
        %v468 = vld [vmem:[%s2 + $0x228] sm:$0xff]
        %v469 = vld [vmem:[%s2 + $0x230] sm:$0xff]
        %v470 = vld [vmem:[%s2 + $0x238] sm:$0xff]
        %v471 = vld [vmem:[%s2 + $0x240] sm:$0xff]
        %v472 = vld [vmem:[%s2 + $0x248] sm:$0xff]
        %v473 = vld [vmem:[%s2 + $0x250] sm:$0xff]
        %v474 = vld [vmem:[%s2 + $0x258] sm:$0xff]
        %v475 = vld [vmem:[%s2 + $0x260] sm:$0xff]
        %v476 = vld [vmem:[%s2 + $0x268] sm:$0xff]
        %v477 = vld [vmem:[%s2 + $0x270] sm:$0xff]
        %v478 = vld [vmem:[%s2 + $0x278] sm:$0xff]
        %v479 = vld [vmem:[%s2 + $0x280] sm:$0xff]
        %v480 = vld [vmem:[%s2 + $0x288] sm:$0xff]
        %v481 = vld [vmem:[%s2 + $0x290] sm:$0xff]
        %v482 = vld [vmem:[%s2 + $0x298] sm:$0xff]
        %v483 = vld [vmem:[%s2 + $0x2a0] sm:$0xff]
        %v484 = vld [vmem:[%s2 + $0x2a8] sm:$0xff]
        %v485 = vld [vmem:[%s2 + $0x2b0] sm:$0xff]
        %v486 = vld [vmem:[%s2 + $0x2b8] sm:$0xff]
        %v487 = vld [vmem:[%s2 + $0x2c0] sm:$0xff]
        %v488 = vld [vmem:[%s2 + $0x2c8] sm:$0xff]
        %v489 = vld [vmem:[%s2 + $0x2d0] sm:$0xff]
        %v490 = vld [vmem:[%s2 + $0x2d8] sm:$0xff]
        %v491 = vld [vmem:[%s2 + $0x2e0] sm:$0xff]
        %v492 = vld [vmem:[%s2 + $0x2e8] sm:$0xff]
        %v493 = vld [vmem:[%s2 + $0x2f0] sm:$0xff]
        %v494 = vld [vmem:[%s2 + $0x2f8] sm:$0xff]
        %v495 = vld [vmem:[%s2 + $0x300] sm:$0xff]
        %v496 = vld [vmem:[%s2 + $0x308] sm:$0xff]
        %v497 = vld [vmem:[%s2 + $0x310] sm:$0xff]
        %v498 = vld [vmem:[%s2 + $0x318] sm:$0xff]
        %v499 = vld [vmem:[%s2 + $0x320] sm:$0xff]
        %v500 = vld [vmem:[%s2 + $0x328] sm:$0xff]
        %v501 = vld [vmem:[%s2 + $0x330] sm:$0xff]
        %v502 = vld [vmem:[%s2 + $0x338] sm:$0xff]
        %v503 = vld [vmem:[%s2 + $0x340] sm:$0xff]
        %v504 = vld [vmem:[%s2 + $0x348] sm:$0xff]
        %v505 = vld [vmem:[%s2 + $0x350] sm:$0xff]
        %v506 = vld [vmem:[%s2 + $0x358] sm:$0xff]
        %v507 = vld [vmem:[%s2 + $0x360] sm:$0xff]
        %v508 = vld [vmem:[%s2 + $0x368] sm:$0xff]
        %v509 = vld [vmem:[%s2 + $0x370] sm:$0xff]
        %v510 = vld [vmem:[%s2 + $0x378] sm:$0xff]
        %v511 = vld [vmem:[%s2 + $0x380] sm:$0xff]
        %v512 = vld [vmem:[%s2 + $0x388] sm:$0xff]
        %v513 = vld [vmem:[%s2 + $0x390] sm:$0xff]
        %v514 = vld [vmem:[%s2 + $0x398] sm:$0xff]
        %v515 = vld [vmem:[%s2 + $0x3a0] sm:$0xff]
        %v516 = vld [vmem:[%s2 + $0x3a8] sm:$0xff]
        %v517 = vld [vmem:[%s2 + $0x3b0] sm:$0xff]
        %v518 = vld [vmem:[%s2 + $0x3b8] sm:$0xff]
        %v519 = vld [vmem:[%s2 + $0x3c0] sm:$0xff]
        %v520 = vld [vmem:[%s2 + $0x3c8] sm:$0xff]
        %v521 = vld [vmem:[%s2 + $0x3d0] sm:$0xff]
        %v522 = vld [vmem:[%s2 + $0x3d8] sm:$0xff]
        %v523 = vld [vmem:[%s2 + $0x3e0] sm:$0xff]
        %v524 = vld [vmem:[%s2 + $0x3e8] sm:$0xff]
        %v525 = vld [vmem:[%s2 + $0x3f0] sm:$0xff]
        %v526 = vld [vmem:[%s2 + $0x3f8] sm:$0xff]
        %v527 = vld [vmem:[%s4 + $0x2] sm:$0xff]
        %v529 = vperm.slane %v527, 0
        %v530 = vperm.slane %v527, 1
        %v531 = vperm.slane %v527, 2
        %v532 = vperm.slane %v527, 3
        %v533 = vperm.slane %v527, 4
        %v534 = vperm.slane %v527, 5
        %v535 = vperm.slane %v527, 6
        %v536 = vperm.slane %v527, 7
        %545 = vmatpush.msra.mxu0 %v519
        %546 = vmatpush.msra.mxu0 %v511
        %547 = vmatpush.msra.mxu0 %v503
        %548 = vmatpush.msra.mxu0 %v495
        %549 = vmatpush.msra.mxu0 %v487
        %550 = vmatpush.msra.mxu0 %v479
        %551 = vmatpush.msra.mxu0 %v471
        %552 = vmatpush.msra.mxu0 %v463
        %553 = vmatpush.msra.mxu0 %v455
        %554 = vmatpush.msra.mxu0 %v447
        %555 = vmatpush.msra.mxu0 %v439
        %556 = vmatpush.msra.mxu0 %v431
        %557 = vmatpush.msra.mxu0 %v423
        %558 = vmatpush.msra.mxu0 %v415
        %559 = vmatpush.msra.mxu0 %v407
        %560 = vmatpush.msra.mxu0 %v399
        %561 = vmatmul.f32.gmra.mxu0 %v383
        %v562 = vpop.f32.mrf.mxu0
        %v563 = vadd.f32 %v529, %v562
        %564 = vmatmul.f32.gmra.mxu0 %v384
        %v565 = vpop.f32.mrf.mxu0
        %v566 = vadd.f32 %v529, %v565
        %567 = vmatmul.f32.gmra.mxu0 %v385
        %v568 = vpop.f32.mrf.mxu0
        %v569 = vadd.f32 %v529, %v568
        %570 = vmatmul.f32.gmra.mxu0 %v386
        %v571 = vpop.f32.mrf.mxu0
        %v572 = vadd.f32 %v529, %v571
        %573 = vmatmul.f32.gmra.mxu0 %v387
        %v574 = vpop.f32.mrf.mxu0
        %v575 = vadd.f32 %v529, %v574
        %576 = vmatmul.f32.gmra.mxu0 %v388
        %v577 = vpop.f32.mrf.mxu0
        %v578 = vadd.f32 %v529, %v577
        %579 = vmatmul.f32.gmra.mxu0 %v389
        %v580 = vpop.f32.mrf.mxu0
        %v581 = vadd.f32 %v529, %v580
        %582 = vmatmul.f32.gmra.mxu0 %v390
        %v583 = vpop.f32.mrf.mxu0
        %v584 = vadd.f32 %v529, %v583
        %585 = vmatmul.f32.gmra.mxu0 %v391
        %v586 = vpop.f32.mrf.mxu0
        %v587 = vadd.f32 %v529, %v586
        %588 = vmatmul.f32.gmra.mxu0 %v392
        %v589 = vpop.f32.mrf.mxu0
        %v590 = vadd.f32 %v529, %v589
        %591 = vmatmul.f32.gmra.mxu0 %v393
        %v592 = vpop.f32.mrf.mxu0
        %v593 = vadd.f32 %v529, %v592
        %594 = vmatmul.f32.gmra.mxu0 %v394
        %v595 = vpop.f32.mrf.mxu0
        %v596 = vadd.f32 %v529, %v595
        %597 = vmatmul.f32.gmra.mxu0 %v395
        %v598 = vpop.f32.mrf.mxu0
        %v599 = vadd.f32 %v529, %v598
        %600 = vmatmul.f32.gmra.mxu0 %v396
        %v601 = vpop.f32.mrf.mxu0
        %v602 = vadd.f32 %v529, %v601
        %603 = vmatmul.f32.gmra.mxu0 %v397
        %v604 = vpop.f32.mrf.mxu0
        %v605 = vadd.f32 %v529, %v604
        %606 = vmatmul.f32.gmra.mxu0 %v398
        %v607 = vpop.f32.mrf.mxu0
        %v608 = vadd.f32 %v529, %v607
        %609 = vdwg.mxu0
        %610 = vmatpush.msra.mxu0 %v520
        %611 = vmatpush.msra.mxu0 %v512
        %612 = vmatpush.msra.mxu0 %v504
        %613 = vmatpush.msra.mxu0 %v496
        %614 = vmatpush.msra.mxu0 %v488
        %615 = vmatpush.msra.mxu0 %v480
        %616 = vmatpush.msra.mxu0 %v472
        %617 = vmatpush.msra.mxu0 %v464
        %618 = vmatpush.msra.mxu0 %v456
        %619 = vmatpush.msra.mxu0 %v448
        %620 = vmatpush.msra.mxu0 %v440
        %621 = vmatpush.msra.mxu0 %v432
        %622 = vmatpush.msra.mxu0 %v424
        %623 = vmatpush.msra.mxu0 %v416
        %624 = vmatpush.msra.mxu0 %v408
        %625 = vmatpush.msra.mxu0 %v400
        %626 = vmatmul.f32.gmra.mxu0 %v383
        %v627 = vpop.f32.mrf.mxu0
        %v628 = vadd.f32 %v530, %v627
        %629 = vmatmul.f32.gmra.mxu0 %v384
        %v630 = vpop.f32.mrf.mxu0
        %v631 = vadd.f32 %v530, %v630
        %632 = vmatmul.f32.gmra.mxu0 %v385
        %v633 = vpop.f32.mrf.mxu0
        %v634 = vadd.f32 %v530, %v633
        %635 = vmatmul.f32.gmra.mxu0 %v386
        %v636 = vpop.f32.mrf.mxu0
        %v637 = vadd.f32 %v530, %v636
        %638 = vmatmul.f32.gmra.mxu0 %v387
        %v639 = vpop.f32.mrf.mxu0
        %v640 = vadd.f32 %v530, %v639
        %641 = vmatmul.f32.gmra.mxu0 %v388
        %v642 = vpop.f32.mrf.mxu0
        %v643 = vadd.f32 %v530, %v642
        %644 = vmatmul.f32.gmra.mxu0 %v389
        %v645 = vpop.f32.mrf.mxu0
        %v646 = vadd.f32 %v530, %v645
        %647 = vmatmul.f32.gmra.mxu0 %v390
        %v648 = vpop.f32.mrf.mxu0
        %v649 = vadd.f32 %v530, %v648
        %650 = vmatmul.f32.gmra.mxu0 %v391
        %v651 = vpop.f32.mrf.mxu0
        %v652 = vadd.f32 %v530, %v651
        %653 = vmatmul.f32.gmra.mxu0 %v392
        %v654 = vpop.f32.mrf.mxu0
        %v655 = vadd.f32 %v530, %v654
        %656 = vmatmul.f32.gmra.mxu0 %v393
        %v657 = vpop.f32.mrf.mxu0
        %v658 = vadd.f32 %v530, %v657
        %659 = vmatmul.f32.gmra.mxu0 %v394
        %v660 = vpop.f32.mrf.mxu0
        %v661 = vadd.f32 %v530, %v660
        %662 = vmatmul.f32.gmra.mxu0 %v395
        %v663 = vpop.f32.mrf.mxu0
        %v664 = vadd.f32 %v530, %v663
        %665 = vmatmul.f32.gmra.mxu0 %v396
        %v666 = vpop.f32.mrf.mxu0
        %v667 = vadd.f32 %v530, %v666
        %668 = vmatmul.f32.gmra.mxu0 %v397
        %v669 = vpop.f32.mrf.mxu0
        %v670 = vadd.f32 %v530, %v669
        %671 = vmatmul.f32.gmra.mxu0 %v398
        %v672 = vpop.f32.mrf.mxu0
        %v673 = vadd.f32 %v530, %v672
        %674 = vdwg.mxu0
        %675 = vmatpush.msra.mxu0 %v521
        %676 = vmatpush.msra.mxu0 %v513
        %677 = vmatpush.msra.mxu0 %v505
        %678 = vmatpush.msra.mxu0 %v497
        %679 = vmatpush.msra.mxu0 %v489
        %680 = vmatpush.msra.mxu0 %v481
        %681 = vmatpush.msra.mxu0 %v473
        %682 = vmatpush.msra.mxu0 %v465
        %683 = vmatpush.msra.mxu0 %v457
        %684 = vmatpush.msra.mxu0 %v449
        %685 = vmatpush.msra.mxu0 %v441
        %686 = vmatpush.msra.mxu0 %v433
        %687 = vmatpush.msra.mxu0 %v425
        %688 = vmatpush.msra.mxu0 %v417
        %689 = vmatpush.msra.mxu0 %v409
        %690 = vmatpush.msra.mxu0 %v401
        %691 = vmatmul.f32.gmra.mxu0 %v383
        %v692 = vpop.f32.mrf.mxu0
        %v693 = vadd.f32 %v531, %v692
        %694 = vmatmul.f32.gmra.mxu0 %v384
        %v695 = vpop.f32.mrf.mxu0
        %v696 = vadd.f32 %v531, %v695
        %697 = vmatmul.f32.gmra.mxu0 %v385
        %v698 = vpop.f32.mrf.mxu0
        %v699 = vadd.f32 %v531, %v698
        %700 = vmatmul.f32.gmra.mxu0 %v386
        %v701 = vpop.f32.mrf.mxu0
        %v702 = vadd.f32 %v531, %v701
        %703 = vmatmul.f32.gmra.mxu0 %v387
        %v704 = vpop.f32.mrf.mxu0
        %v705 = vadd.f32 %v531, %v704
        %706 = vmatmul.f32.gmra.mxu0 %v388
        %v707 = vpop.f32.mrf.mxu0
        %v708 = vadd.f32 %v531, %v707
        %709 = vmatmul.f32.gmra.mxu0 %v389
        %v710 = vpop.f32.mrf.mxu0
        %v711 = vadd.f32 %v531, %v710
        %712 = vmatmul.f32.gmra.mxu0 %v390
        %v713 = vpop.f32.mrf.mxu0
        %v714 = vadd.f32 %v531, %v713
        %715 = vmatmul.f32.gmra.mxu0 %v391
        %v716 = vpop.f32.mrf.mxu0
        %v717 = vadd.f32 %v531, %v716
        %718 = vmatmul.f32.gmra.mxu0 %v392
        %v719 = vpop.f32.mrf.mxu0
        %v720 = vadd.f32 %v531, %v719
        %721 = vmatmul.f32.gmra.mxu0 %v393
        %v722 = vpop.f32.mrf.mxu0
        %v723 = vadd.f32 %v531, %v722
        %724 = vmatmul.f32.gmra.mxu0 %v394
        %v725 = vpop.f32.mrf.mxu0
        %v726 = vadd.f32 %v531, %v725
        %727 = vmatmul.f32.gmra.mxu0 %v395
        %v728 = vpop.f32.mrf.mxu0
        %v729 = vadd.f32 %v531, %v728
        %730 = vmatmul.f32.gmra.mxu0 %v396
        %v731 = vpop.f32.mrf.mxu0
        %v732 = vadd.f32 %v531, %v731
        %733 = vmatmul.f32.gmra.mxu0 %v397
        %v734 = vpop.f32.mrf.mxu0
        %v735 = vadd.f32 %v531, %v734
        %736 = vmatmul.f32.gmra.mxu0 %v398
        %v737 = vpop.f32.mrf.mxu0
        %v738 = vadd.f32 %v531, %v737
        %739 = vdwg.mxu0
        %740 = vmatpush.msra.mxu0 %v522
        %741 = vmatpush.msra.mxu0 %v514
        %742 = vmatpush.msra.mxu0 %v506
        %743 = vmatpush.msra.mxu0 %v498
        %744 = vmatpush.msra.mxu0 %v490
        %745 = vmatpush.msra.mxu0 %v482
        %746 = vmatpush.msra.mxu0 %v474
        %747 = vmatpush.msra.mxu0 %v466
        %748 = vmatpush.msra.mxu0 %v458
        %749 = vmatpush.msra.mxu0 %v450
        %750 = vmatpush.msra.mxu0 %v442
        %751 = vmatpush.msra.mxu0 %v434
        %752 = vmatpush.msra.mxu0 %v426
        %753 = vmatpush.msra.mxu0 %v418
        %754 = vmatpush.msra.mxu0 %v410
        %755 = vmatpush.msra.mxu0 %v402
        %756 = vmatmul.f32.gmra.mxu0 %v383
        %v757 = vpop.f32.mrf.mxu0
        %v758 = vadd.f32 %v532, %v757
        %759 = vmatmul.f32.gmra.mxu0 %v384
        %v760 = vpop.f32.mrf.mxu0
        %v761 = vadd.f32 %v532, %v760
        %762 = vmatmul.f32.gmra.mxu0 %v385
        %v763 = vpop.f32.mrf.mxu0
        %v764 = vadd.f32 %v532, %v763
        %765 = vmatmul.f32.gmra.mxu0 %v386
        %v766 = vpop.f32.mrf.mxu0
        %v767 = vadd.f32 %v532, %v766
        %768 = vmatmul.f32.gmra.mxu0 %v387
        %v769 = vpop.f32.mrf.mxu0
        %v770 = vadd.f32 %v532, %v769
        %771 = vmatmul.f32.gmra.mxu0 %v388
        %v772 = vpop.f32.mrf.mxu0
        %v773 = vadd.f32 %v532, %v772
        %774 = vmatmul.f32.gmra.mxu0 %v389
        %v775 = vpop.f32.mrf.mxu0
        %v776 = vadd.f32 %v532, %v775
        %777 = vmatmul.f32.gmra.mxu0 %v390
        %v778 = vpop.f32.mrf.mxu0
        %v779 = vadd.f32 %v532, %v778
        %780 = vmatmul.f32.gmra.mxu0 %v391
        %v781 = vpop.f32.mrf.mxu0
        %v782 = vadd.f32 %v532, %v781
        %783 = vmatmul.f32.gmra.mxu0 %v392
        %v784 = vpop.f32.mrf.mxu0
        %v785 = vadd.f32 %v532, %v784
        %786 = vmatmul.f32.gmra.mxu0 %v393
        %v787 = vpop.f32.mrf.mxu0
        %v788 = vadd.f32 %v532, %v787
        %789 = vmatmul.f32.gmra.mxu0 %v394
        %v790 = vpop.f32.mrf.mxu0
        %v791 = vadd.f32 %v532, %v790
        %792 = vmatmul.f32.gmra.mxu0 %v395
        %v793 = vpop.f32.mrf.mxu0
        %v794 = vadd.f32 %v532, %v793
        %795 = vmatmul.f32.gmra.mxu0 %v396
        %v796 = vpop.f32.mrf.mxu0
        %v797 = vadd.f32 %v532, %v796
        %798 = vmatmul.f32.gmra.mxu0 %v397
        %v799 = vpop.f32.mrf.mxu0
        %v800 = vadd.f32 %v532, %v799
        %801 = vmatmul.f32.gmra.mxu0 %v398
        %v802 = vpop.f32.mrf.mxu0
        %v803 = vadd.f32 %v532, %v802
        %804 = vdwg.mxu0
        %805 = vmatpush.msra.mxu0 %v523
        %806 = vmatpush.msra.mxu0 %v515
        %807 = vmatpush.msra.mxu0 %v507
        %808 = vmatpush.msra.mxu0 %v499
        %809 = vmatpush.msra.mxu0 %v491
        %810 = vmatpush.msra.mxu0 %v483
        %811 = vmatpush.msra.mxu0 %v475
        %812 = vmatpush.msra.mxu0 %v467
        %813 = vmatpush.msra.mxu0 %v459
        %814 = vmatpush.msra.mxu0 %v451
        %815 = vmatpush.msra.mxu0 %v443
        %816 = vmatpush.msra.mxu0 %v435
        %817 = vmatpush.msra.mxu0 %v427
        %818 = vmatpush.msra.mxu0 %v419
        %819 = vmatpush.msra.mxu0 %v411
        %820 = vmatpush.msra.mxu0 %v403
        %821 = vmatmul.f32.gmra.mxu0 %v383
        %v822 = vpop.f32.mrf.mxu0
        %v823 = vadd.f32 %v533, %v822
        %824 = vmatmul.f32.gmra.mxu0 %v384
        %v825 = vpop.f32.mrf.mxu0
        %v826 = vadd.f32 %v533, %v825
        %827 = vmatmul.f32.gmra.mxu0 %v385
        %v828 = vpop.f32.mrf.mxu0
        %v829 = vadd.f32 %v533, %v828
        %830 = vmatmul.f32.gmra.mxu0 %v386
        %v831 = vpop.f32.mrf.mxu0
        %v832 = vadd.f32 %v533, %v831
        %833 = vmatmul.f32.gmra.mxu0 %v387
        %v834 = vpop.f32.mrf.mxu0
        %v835 = vadd.f32 %v533, %v834
        %836 = vmatmul.f32.gmra.mxu0 %v388
        %v837 = vpop.f32.mrf.mxu0
        %v838 = vadd.f32 %v533, %v837
        %839 = vmatmul.f32.gmra.mxu0 %v389
        %v840 = vpop.f32.mrf.mxu0
        %v841 = vadd.f32 %v533, %v840
        %842 = vmatmul.f32.gmra.mxu0 %v390
        %v843 = vpop.f32.mrf.mxu0
        %v844 = vadd.f32 %v533, %v843
        %845 = vmatmul.f32.gmra.mxu0 %v391
        %v846 = vpop.f32.mrf.mxu0
        %v847 = vadd.f32 %v533, %v846
        %848 = vmatmul.f32.gmra.mxu0 %v392
        %v849 = vpop.f32.mrf.mxu0
        %v850 = vadd.f32 %v533, %v849
        %851 = vmatmul.f32.gmra.mxu0 %v393
        %v852 = vpop.f32.mrf.mxu0
        %v853 = vadd.f32 %v533, %v852
        %854 = vmatmul.f32.gmra.mxu0 %v394
        %v855 = vpop.f32.mrf.mxu0
        %v856 = vadd.f32 %v533, %v855
        %857 = vmatmul.f32.gmra.mxu0 %v395
        %v858 = vpop.f32.mrf.mxu0
        %v859 = vadd.f32 %v533, %v858
        %860 = vmatmul.f32.gmra.mxu0 %v396
        %v861 = vpop.f32.mrf.mxu0
        %v862 = vadd.f32 %v533, %v861
        %863 = vmatmul.f32.gmra.mxu0 %v397
        %v864 = vpop.f32.mrf.mxu0
        %v865 = vadd.f32 %v533, %v864
        %866 = vmatmul.f32.gmra.mxu0 %v398
        %v867 = vpop.f32.mrf.mxu0
        %v868 = vadd.f32 %v533, %v867
        %869 = vdwg.mxu0
        %870 = vmatpush.msra.mxu0 %v524
        %871 = vmatpush.msra.mxu0 %v516
        %872 = vmatpush.msra.mxu0 %v508
        %873 = vmatpush.msra.mxu0 %v500
        %874 = vmatpush.msra.mxu0 %v492
        %875 = vmatpush.msra.mxu0 %v484
        %876 = vmatpush.msra.mxu0 %v476
        %877 = vmatpush.msra.mxu0 %v468
        %878 = vmatpush.msra.mxu0 %v460
        %879 = vmatpush.msra.mxu0 %v452
        %880 = vmatpush.msra.mxu0 %v444
        %881 = vmatpush.msra.mxu0 %v436
        %882 = vmatpush.msra.mxu0 %v428
        %883 = vmatpush.msra.mxu0 %v420
        %884 = vmatpush.msra.mxu0 %v412
        %885 = vmatpush.msra.mxu0 %v404
        %886 = vmatmul.f32.gmra.mxu0 %v383
        %v887 = vpop.f32.mrf.mxu0
        %v888 = vadd.f32 %v534, %v887
        %889 = vmatmul.f32.gmra.mxu0 %v384
        %v890 = vpop.f32.mrf.mxu0
        %v891 = vadd.f32 %v534, %v890
        %892 = vmatmul.f32.gmra.mxu0 %v385
        %v893 = vpop.f32.mrf.mxu0
        %v894 = vadd.f32 %v534, %v893
        %895 = vmatmul.f32.gmra.mxu0 %v386
        %v896 = vpop.f32.mrf.mxu0
        %v897 = vadd.f32 %v534, %v896
        %898 = vmatmul.f32.gmra.mxu0 %v387
        %v899 = vpop.f32.mrf.mxu0
        %v900 = vadd.f32 %v534, %v899
        %901 = vmatmul.f32.gmra.mxu0 %v388
        %v902 = vpop.f32.mrf.mxu0
        %v903 = vadd.f32 %v534, %v902
        %904 = vmatmul.f32.gmra.mxu0 %v389
        %v905 = vpop.f32.mrf.mxu0
        %v906 = vadd.f32 %v534, %v905
        %907 = vmatmul.f32.gmra.mxu0 %v390
        %v908 = vpop.f32.mrf.mxu0
        %v909 = vadd.f32 %v534, %v908
        %910 = vmatmul.f32.gmra.mxu0 %v391
        %v911 = vpop.f32.mrf.mxu0
        %v912 = vadd.f32 %v534, %v911
        %913 = vmatmul.f32.gmra.mxu0 %v392
        %v914 = vpop.f32.mrf.mxu0
        %v915 = vadd.f32 %v534, %v914
        %916 = vmatmul.f32.gmra.mxu0 %v393
        %v917 = vpop.f32.mrf.mxu0
        %v918 = vadd.f32 %v534, %v917
        %919 = vmatmul.f32.gmra.mxu0 %v394
        %v920 = vpop.f32.mrf.mxu0
        %v921 = vadd.f32 %v534, %v920
        %922 = vmatmul.f32.gmra.mxu0 %v395
        %v923 = vpop.f32.mrf.mxu0
        %v924 = vadd.f32 %v534, %v923
        %925 = vmatmul.f32.gmra.mxu0 %v396
        %v926 = vpop.f32.mrf.mxu0
        %v927 = vadd.f32 %v534, %v926
        %928 = vmatmul.f32.gmra.mxu0 %v397
        %v929 = vpop.f32.mrf.mxu0
        %v930 = vadd.f32 %v534, %v929
        %931 = vmatmul.f32.gmra.mxu0 %v398
        %v932 = vpop.f32.mrf.mxu0
        %v933 = vadd.f32 %v534, %v932
        %934 = vdwg.mxu0
        %935 = vmatpush.msra.mxu0 %v525
        %936 = vmatpush.msra.mxu0 %v517
        %937 = vmatpush.msra.mxu0 %v509
        %938 = vmatpush.msra.mxu0 %v501
        %939 = vmatpush.msra.mxu0 %v493
        %940 = vmatpush.msra.mxu0 %v485
        %941 = vmatpush.msra.mxu0 %v477
        %942 = vmatpush.msra.mxu0 %v469
        %943 = vmatpush.msra.mxu0 %v461
        %944 = vmatpush.msra.mxu0 %v453
        %945 = vmatpush.msra.mxu0 %v445
        %946 = vmatpush.msra.mxu0 %v437
        %947 = vmatpush.msra.mxu0 %v429
        %948 = vmatpush.msra.mxu0 %v421
        %949 = vmatpush.msra.mxu0 %v413
        %950 = vmatpush.msra.mxu0 %v405
        %951 = vmatmul.f32.gmra.mxu0 %v383
        %v952 = vpop.f32.mrf.mxu0
        %v953 = vadd.f32 %v535, %v952
        %954 = vmatmul.f32.gmra.mxu0 %v384
        %v955 = vpop.f32.mrf.mxu0
        %v956 = vadd.f32 %v535, %v955
        %957 = vmatmul.f32.gmra.mxu0 %v385
        %v958 = vpop.f32.mrf.mxu0
        %v959 = vadd.f32 %v535, %v958
        %960 = vmatmul.f32.gmra.mxu0 %v386
        %v961 = vpop.f32.mrf.mxu0
        %v962 = vadd.f32 %v535, %v961
        %963 = vmatmul.f32.gmra.mxu0 %v387
        %v964 = vpop.f32.mrf.mxu0
        %v965 = vadd.f32 %v535, %v964
        %966 = vmatmul.f32.gmra.mxu0 %v388
        %v967 = vpop.f32.mrf.mxu0
        %v968 = vadd.f32 %v535, %v967
        %969 = vmatmul.f32.gmra.mxu0 %v389
        %v970 = vpop.f32.mrf.mxu0
        %v971 = vadd.f32 %v535, %v970
        %972 = vmatmul.f32.gmra.mxu0 %v390
        %v973 = vpop.f32.mrf.mxu0
        %v974 = vadd.f32 %v535, %v973
        %975 = vmatmul.f32.gmra.mxu0 %v391
        %v976 = vpop.f32.mrf.mxu0
        %v977 = vadd.f32 %v535, %v976
        %978 = vmatmul.f32.gmra.mxu0 %v392
        %v979 = vpop.f32.mrf.mxu0
        %v980 = vadd.f32 %v535, %v979
        %981 = vmatmul.f32.gmra.mxu0 %v393
        %v982 = vpop.f32.mrf.mxu0
        %v983 = vadd.f32 %v535, %v982
        %984 = vmatmul.f32.gmra.mxu0 %v394
        %v985 = vpop.f32.mrf.mxu0
        %v986 = vadd.f32 %v535, %v985
        %987 = vmatmul.f32.gmra.mxu0 %v395
        %v988 = vpop.f32.mrf.mxu0
        %v989 = vadd.f32 %v535, %v988
        %990 = vmatmul.f32.gmra.mxu0 %v396
        %v991 = vpop.f32.mrf.mxu0
        %v992 = vadd.f32 %v535, %v991
        %993 = vmatmul.f32.gmra.mxu0 %v397
        %v994 = vpop.f32.mrf.mxu0
        %v995 = vadd.f32 %v535, %v994
        %996 = vmatmul.f32.gmra.mxu0 %v398
        %v997 = vpop.f32.mrf.mxu0
        %v998 = vadd.f32 %v535, %v997
        %999 = vdwg.mxu0
        %1000 = vmatpush.msra.mxu0 %v526
        %1001 = vmatpush.msra.mxu0 %v518
        %1002 = vmatpush.msra.mxu0 %v510
        %1003 = vmatpush.msra.mxu0 %v502
        %1004 = vmatpush.msra.mxu0 %v494
        %1005 = vmatpush.msra.mxu0 %v486
        %1006 = vmatpush.msra.mxu0 %v478
        %1007 = vmatpush.msra.mxu0 %v470
        %1008 = vmatpush.msra.mxu0 %v462
        %1009 = vmatpush.msra.mxu0 %v454
        %1010 = vmatpush.msra.mxu0 %v446
        %1011 = vmatpush.msra.mxu0 %v438
        %1012 = vmatpush.msra.mxu0 %v430
        %1013 = vmatpush.msra.mxu0 %v422
        %1014 = vmatpush.msra.mxu0 %v414
        %1015 = vmatpush.msra.mxu0 %v406
        %1016 = vmatmul.f32.gmra.mxu0 %v383
        %v1017 = vpop.f32.mrf.mxu0
        %v1018 = vadd.f32 %v536, %v1017
        %1019 = vmatmul.f32.gmra.mxu0 %v384
        %v1020 = vpop.f32.mrf.mxu0
        %v1021 = vadd.f32 %v536, %v1020
        %1022 = vmatmul.f32.gmra.mxu0 %v385
        %v1023 = vpop.f32.mrf.mxu0
        %v1024 = vadd.f32 %v536, %v1023
        %1025 = vmatmul.f32.gmra.mxu0 %v386
        %v1026 = vpop.f32.mrf.mxu0
        %v1027 = vadd.f32 %v536, %v1026
        %1028 = vmatmul.f32.gmra.mxu0 %v387
        %v1029 = vpop.f32.mrf.mxu0
        %v1030 = vadd.f32 %v536, %v1029
        %1031 = vmatmul.f32.gmra.mxu0 %v388
        %v1032 = vpop.f32.mrf.mxu0
        %v1033 = vadd.f32 %v536, %v1032
        %1034 = vmatmul.f32.gmra.mxu0 %v389
        %v1035 = vpop.f32.mrf.mxu0
        %v1036 = vadd.f32 %v536, %v1035
        %1037 = vmatmul.f32.gmra.mxu0 %v390
        %v1038 = vpop.f32.mrf.mxu0
        %v1039 = vadd.f32 %v536, %v1038
        %1040 = vmatmul.f32.gmra.mxu0 %v391
        %v1041 = vpop.f32.mrf.mxu0
        %v1042 = vadd.f32 %v536, %v1041
        %1043 = vmatmul.f32.gmra.mxu0 %v392
        %v1044 = vpop.f32.mrf.mxu0
        %v1045 = vadd.f32 %v536, %v1044
        %1046 = vmatmul.f32.gmra.mxu0 %v393
        %v1047 = vpop.f32.mrf.mxu0
        %v1048 = vadd.f32 %v536, %v1047
        %1049 = vmatmul.f32.gmra.mxu0 %v394
        %v1050 = vpop.f32.mrf.mxu0
        %v1051 = vadd.f32 %v536, %v1050
        %1052 = vmatmul.f32.gmra.mxu0 %v395
        %v1053 = vpop.f32.mrf.mxu0
        %v1054 = vadd.f32 %v536, %v1053
        %1055 = vmatmul.f32.gmra.mxu0 %v396
        %v1056 = vpop.f32.mrf.mxu0
        %v1057 = vadd.f32 %v536, %v1056
        %1058 = vmatmul.f32.gmra.mxu0 %v397
        %v1059 = vpop.f32.mrf.mxu0
        %v1060 = vadd.f32 %v536, %v1059
        %1061 = vmatmul.f32.gmra.mxu0 %v398
        %v1062 = vpop.f32.mrf.mxu0
        %v1063 = vadd.f32 %v536, %v1062
        %1064 = vdwg.mxu0
        %v1065 = vmax.f32 %v563, 0.0
        %v1066 = vmax.f32 %v628, 0.0
        %v1067 = vmax.f32 %v693, 0.0
        %v1068 = vmax.f32 %v758, 0.0
        %v1069 = vmax.f32 %v823, 0.0
        %v1070 = vmax.f32 %v888, 0.0
        %v1071 = vmax.f32 %v953, 0.0
        %v1072 = vmax.f32 %v1018, 0.0
        %v1073 = vmax.f32 %v566, 0.0
        %v1074 = vmax.f32 %v631, 0.0
        %v1075 = vmax.f32 %v696, 0.0
        %v1076 = vmax.f32 %v761, 0.0
        %v1077 = vmax.f32 %v826, 0.0
        %v1078 = vmax.f32 %v891, 0.0
        %v1079 = vmax.f32 %v956, 0.0
        %v1080 = vmax.f32 %v1021, 0.0
        %v1081 = vmax.f32 %v569, 0.0
        %v1082 = vmax.f32 %v634, 0.0
        %v1083 = vmax.f32 %v699, 0.0
        %v1084 = vmax.f32 %v764, 0.0
        %v1085 = vmax.f32 %v829, 0.0
        %v1086 = vmax.f32 %v894, 0.0
        %v1087 = vmax.f32 %v959, 0.0
        %v1088 = vmax.f32 %v1024, 0.0
        %v1089 = vmax.f32 %v572, 0.0
        %v1090 = vmax.f32 %v637, 0.0
        %v1091 = vmax.f32 %v702, 0.0
        %v1092 = vmax.f32 %v767, 0.0
        %v1093 = vmax.f32 %v832, 0.0
        %v1094 = vmax.f32 %v897, 0.0
        %v1095 = vmax.f32 %v962, 0.0
        %v1096 = vmax.f32 %v1027, 0.0
        %v1097 = vmax.f32 %v575, 0.0
        %v1098 = vmax.f32 %v640, 0.0
        %v1099 = vmax.f32 %v705, 0.0
        %v1100 = vmax.f32 %v770, 0.0
        %v1101 = vmax.f32 %v835, 0.0
        %v1102 = vmax.f32 %v900, 0.0
        %v1103 = vmax.f32 %v965, 0.0
        %v1104 = vmax.f32 %v1030, 0.0
        %v1105 = vmax.f32 %v578, 0.0
        %v1106 = vmax.f32 %v643, 0.0
        %v1107 = vmax.f32 %v708, 0.0
        %v1108 = vmax.f32 %v773, 0.0
        %v1109 = vmax.f32 %v838, 0.0
        %v1110 = vmax.f32 %v903, 0.0
        %v1111 = vmax.f32 %v968, 0.0
        %v1112 = vmax.f32 %v1033, 0.0
        %v1113 = vmax.f32 %v581, 0.0
        %v1114 = vmax.f32 %v646, 0.0
        %v1115 = vmax.f32 %v711, 0.0
        %v1116 = vmax.f32 %v776, 0.0
        %v1117 = vmax.f32 %v841, 0.0
        %v1118 = vmax.f32 %v906, 0.0
        %v1119 = vmax.f32 %v971, 0.0
        %v1120 = vmax.f32 %v1036, 0.0
        %v1121 = vmax.f32 %v584, 0.0
        %v1122 = vmax.f32 %v649, 0.0
        %v1123 = vmax.f32 %v714, 0.0
        %v1124 = vmax.f32 %v779, 0.0
        %v1125 = vmax.f32 %v844, 0.0
        %v1126 = vmax.f32 %v909, 0.0
        %v1127 = vmax.f32 %v974, 0.0
        %v1128 = vmax.f32 %v1039, 0.0
        %v1129 = vmax.f32 %v587, 0.0
        %v1130 = vmax.f32 %v652, 0.0
        %v1131 = vmax.f32 %v717, 0.0
        %v1132 = vmax.f32 %v782, 0.0
        %v1133 = vmax.f32 %v847, 0.0
        %v1134 = vmax.f32 %v912, 0.0
        %v1135 = vmax.f32 %v977, 0.0
        %v1136 = vmax.f32 %v1042, 0.0
        %v1137 = vmax.f32 %v590, 0.0
        %v1138 = vmax.f32 %v655, 0.0
        %v1139 = vmax.f32 %v720, 0.0
        %v1140 = vmax.f32 %v785, 0.0
        %v1141 = vmax.f32 %v850, 0.0
        %v1142 = vmax.f32 %v915, 0.0
        %v1143 = vmax.f32 %v980, 0.0
        %v1144 = vmax.f32 %v1045, 0.0
        %v1145 = vmax.f32 %v593, 0.0
        %v1146 = vmax.f32 %v658, 0.0
        %v1147 = vmax.f32 %v723, 0.0
        %v1148 = vmax.f32 %v788, 0.0
        %v1149 = vmax.f32 %v853, 0.0
        %v1150 = vmax.f32 %v918, 0.0
        %v1151 = vmax.f32 %v983, 0.0
        %v1152 = vmax.f32 %v1048, 0.0
        %v1153 = vmax.f32 %v596, 0.0
        %v1154 = vmax.f32 %v661, 0.0
        %v1155 = vmax.f32 %v726, 0.0
        %v1156 = vmax.f32 %v791, 0.0
        %v1157 = vmax.f32 %v856, 0.0
        %v1158 = vmax.f32 %v921, 0.0
        %v1159 = vmax.f32 %v986, 0.0
        %v1160 = vmax.f32 %v1051, 0.0
        %v1161 = vmax.f32 %v599, 0.0
        %v1162 = vmax.f32 %v664, 0.0
        %v1163 = vmax.f32 %v729, 0.0
        %v1164 = vmax.f32 %v794, 0.0
        %v1165 = vmax.f32 %v859, 0.0
        %v1166 = vmax.f32 %v924, 0.0
        %v1167 = vmax.f32 %v989, 0.0
        %v1168 = vmax.f32 %v1054, 0.0
        %v1169 = vmax.f32 %v602, 0.0
        %v1170 = vmax.f32 %v667, 0.0
        %v1171 = vmax.f32 %v732, 0.0
        %v1172 = vmax.f32 %v797, 0.0
        %v1173 = vmax.f32 %v862, 0.0
        %v1174 = vmax.f32 %v927, 0.0
        %v1175 = vmax.f32 %v992, 0.0
        %v1176 = vmax.f32 %v1057, 0.0
        %v1177 = vmax.f32 %v605, 0.0
        %v1178 = vmax.f32 %v670, 0.0
        %v1179 = vmax.f32 %v735, 0.0
        %v1180 = vmax.f32 %v800, 0.0
        %v1181 = vmax.f32 %v865, 0.0
        %v1182 = vmax.f32 %v930, 0.0
        %v1183 = vmax.f32 %v995, 0.0
        %v1184 = vmax.f32 %v1060, 0.0
        %v1185 = vmax.f32 %v608, 0.0
        %v1186 = vmax.f32 %v673, 0.0
        %v1187 = vmax.f32 %v738, 0.0
        %v1188 = vmax.f32 %v803, 0.0
        %v1189 = vmax.f32 %v868, 0.0
        %v1190 = vmax.f32 %v933, 0.0
        %v1191 = vmax.f32 %v998, 0.0
        %v1192 = vmax.f32 %v1063, 0.0
        %1193 = vst [vmem:[%s253 + $0x10] sm:$0xff] %v1065
        %1194 = vst [vmem:[%s253 + $0x18] sm:$0xff] %v1066
        %1195 = vst [vmem:[%s253 + $0x20] sm:$0xff] %v1067
        %1196 = vst [vmem:[%s253 + $0x28] sm:$0xff] %v1068
        %1197 = vst [vmem:[%s253 + $0x30] sm:$0xff] %v1069
        %1198 = vst [vmem:[%s253 + $0x38] sm:$0xff] %v1070
        %1199 = vst [vmem:[%s253 + $0x40] sm:$0xff] %v1071
        %1200 = vst [vmem:[%s253 + $0x48] sm:$0xff] %v1072
        %1201 = vst [vmem:[%s253 + $0x60] sm:$0xff] %v1073
        %1202 = vst [vmem:[%s253 + $0x68] sm:$0xff] %v1074
        %1203 = vst [vmem:[%s253 + $0x70] sm:$0xff] %v1075
        %1204 = vst [vmem:[%s253 + $0x78] sm:$0xff] %v1076
        %1205 = vst [vmem:[%s253 + $0x80] sm:$0xff] %v1077
        %1206 = vst [vmem:[%s253 + $0x88] sm:$0xff] %v1078
        %1207 = vst [vmem:[%s253 + $0x90] sm:$0xff] %v1079
        %1208 = vst [vmem:[%s253 + $0x98] sm:$0xff] %v1080
        %1209 = vst [vmem:[%s253 + $0xb0] sm:$0xff] %v1081
        %1210 = vst [vmem:[%s253 + $0xb8] sm:$0xff] %v1082
        %1211 = vst [vmem:[%s253 + $0xc0] sm:$0xff] %v1083
        %1212 = vst [vmem:[%s253 + $0xc8] sm:$0xff] %v1084
        %1213 = vst [vmem:[%s253 + $0xd0] sm:$0xff] %v1085
        %1214 = vst [vmem:[%s253 + $0xd8] sm:$0xff] %v1086
        %1215 = vst [vmem:[%s253 + $0xe0] sm:$0xff] %v1087
        %1216 = vst [vmem:[%s253 + $0xe8] sm:$0xff] %v1088
        %1217 = vst [vmem:[%s253 + $0x100] sm:$0xff] %v1089
        %1218 = vst [vmem:[%s253 + $0x108] sm:$0xff] %v1090
        %1219 = vst [vmem:[%s253 + $0x110] sm:$0xff] %v1091
        %1220 = vst [vmem:[%s253 + $0x118] sm:$0xff] %v1092
        %1221 = vst [vmem:[%s253 + $0x120] sm:$0xff] %v1093
        %1222 = vst [vmem:[%s253 + $0x128] sm:$0xff] %v1094
        %1223 = vst [vmem:[%s253 + $0x130] sm:$0xff] %v1095
        %1224 = vst [vmem:[%s253 + $0x138] sm:$0xff] %v1096
        %1225 = vst [vmem:[%s253 + $0x150] sm:$0xff] %v1097
        %1226 = vst [vmem:[%s253 + $0x158] sm:$0xff] %v1098
        %1227 = vst [vmem:[%s253 + $0x160] sm:$0xff] %v1099
        %1228 = vst [vmem:[%s253 + $0x168] sm:$0xff] %v1100
        %1229 = vst [vmem:[%s253 + $0x170] sm:$0xff] %v1101
        %1230 = vst [vmem:[%s253 + $0x178] sm:$0xff] %v1102
        %1231 = vst [vmem:[%s253 + $0x180] sm:$0xff] %v1103
        %1232 = vst [vmem:[%s253 + $0x188] sm:$0xff] %v1104
        %1233 = vst [vmem:[%s253 + $0x1a0] sm:$0xff] %v1105
        %1234 = vst [vmem:[%s253 + $0x1a8] sm:$0xff] %v1106
        %1235 = vst [vmem:[%s253 + $0x1b0] sm:$0xff] %v1107
        %1236 = vst [vmem:[%s253 + $0x1b8] sm:$0xff] %v1108
        %1237 = vst [vmem:[%s253 + $0x1c0] sm:$0xff] %v1109
        %1238 = vst [vmem:[%s253 + $0x1c8] sm:$0xff] %v1110
        %1239 = vst [vmem:[%s253 + $0x1d0] sm:$0xff] %v1111
        %1240 = vst [vmem:[%s253 + $0x1d8] sm:$0xff] %v1112
        %1241 = vst [vmem:[%s253 + $0x1f0] sm:$0xff] %v1113
        %1242 = vst [vmem:[%s253 + $0x1f8] sm:$0xff] %v1114
        %1243 = vst [vmem:[%s253 + $0x200] sm:$0xff] %v1115
        %1244 = vst [vmem:[%s253 + $0x208] sm:$0xff] %v1116
        %1245 = vst [vmem:[%s253 + $0x210] sm:$0xff] %v1117
        %1246 = vst [vmem:[%s253 + $0x218] sm:$0xff] %v1118
        %1247 = vst [vmem:[%s253 + $0x220] sm:$0xff] %v1119
        %1248 = vst [vmem:[%s253 + $0x228] sm:$0xff] %v1120
        %1249 = vst [vmem:[%s253 + $0x240] sm:$0xff] %v1121
        %1250 = vst [vmem:[%s253 + $0x248] sm:$0xff] %v1122
        %1251 = vst [vmem:[%s253 + $0x250] sm:$0xff] %v1123
        %1252 = vst [vmem:[%s253 + $0x258] sm:$0xff] %v1124
        %1253 = vst [vmem:[%s253 + $0x260] sm:$0xff] %v1125
        %1254 = vst [vmem:[%s253 + $0x268] sm:$0xff] %v1126
        %1255 = vst [vmem:[%s253 + $0x270] sm:$0xff] %v1127
        %1256 = vst [vmem:[%s253 + $0x278] sm:$0xff] %v1128
        %1257 = vst [vmem:[%s253 + $0x290] sm:$0xff] %v1129
        %1258 = vst [vmem:[%s253 + $0x298] sm:$0xff] %v1130
        %1259 = vst [vmem:[%s253 + $0x2a0] sm:$0xff] %v1131
        %1260 = vst [vmem:[%s253 + $0x2a8] sm:$0xff] %v1132
        %1261 = vst [vmem:[%s253 + $0x2b0] sm:$0xff] %v1133
        %1262 = vst [vmem:[%s253 + $0x2b8] sm:$0xff] %v1134
        %1263 = vst [vmem:[%s253 + $0x2c0] sm:$0xff] %v1135
        %1264 = vst [vmem:[%s253 + $0x2c8] sm:$0xff] %v1136
        %1265 = vst [vmem:[%s253 + $0x2e0] sm:$0xff] %v1137
        %1266 = vst [vmem:[%s253 + $0x2e8] sm:$0xff] %v1138
        %1267 = vst [vmem:[%s253 + $0x2f0] sm:$0xff] %v1139
        %1268 = vst [vmem:[%s253 + $0x2f8] sm:$0xff] %v1140
        %1269 = vst [vmem:[%s253 + $0x300] sm:$0xff] %v1141
        %1270 = vst [vmem:[%s253 + $0x308] sm:$0xff] %v1142
        %1271 = vst [vmem:[%s253 + $0x310] sm:$0xff] %v1143
        %1272 = vst [vmem:[%s253 + $0x318] sm:$0xff] %v1144
        %1273 = vst [vmem:[%s253 + $0x330] sm:$0xff] %v1145
        %1274 = vst [vmem:[%s253 + $0x338] sm:$0xff] %v1146
        %1275 = vst [vmem:[%s253 + $0x340] sm:$0xff] %v1147
        %1276 = vst [vmem:[%s253 + $0x348] sm:$0xff] %v1148
        %1277 = vst [vmem:[%s253 + $0x350] sm:$0xff] %v1149
        %1278 = vst [vmem:[%s253 + $0x358] sm:$0xff] %v1150
        %1279 = vst [vmem:[%s253 + $0x360] sm:$0xff] %v1151
        %1280 = vst [vmem:[%s253 + $0x368] sm:$0xff] %v1152
        %1281 = vst [vmem:[%s253 + $0x380] sm:$0xff] %v1153
        %1282 = vst [vmem:[%s253 + $0x388] sm:$0xff] %v1154
        %1283 = vst [vmem:[%s253 + $0x390] sm:$0xff] %v1155
        %1284 = vst [vmem:[%s253 + $0x398] sm:$0xff] %v1156
        %1285 = vst [vmem:[%s253 + $0x3a0] sm:$0xff] %v1157
        %1286 = vst [vmem:[%s253 + $0x3a8] sm:$0xff] %v1158
        %1287 = vst [vmem:[%s253 + $0x3b0] sm:$0xff] %v1159
        %1288 = vst [vmem:[%s253 + $0x3b8] sm:$0xff] %v1160
        %1289 = vst [vmem:[%s253 + $0x3d0] sm:$0xff] %v1161
        %1290 = vst [vmem:[%s253 + $0x3d8] sm:$0xff] %v1162
        %1291 = vst [vmem:[%s253 + $0x3e0] sm:$0xff] %v1163
        %1292 = vst [vmem:[%s253 + $0x3e8] sm:$0xff] %v1164
        %1293 = vst [vmem:[%s253 + $0x3f0] sm:$0xff] %v1165
        %1294 = vst [vmem:[%s253 + $0x3f8] sm:$0xff] %v1166
        %1295 = vst [vmem:[%s253 + $0x400] sm:$0xff] %v1167
        %1296 = vst [vmem:[%s253 + $0x408] sm:$0xff] %v1168
        %1297 = vst [vmem:[%s253 + $0x420] sm:$0xff] %v1169
        %1298 = vst [vmem:[%s253 + $0x428] sm:$0xff] %v1170
        %1299 = vst [vmem:[%s253 + $0x430] sm:$0xff] %v1171
        %1300 = vst [vmem:[%s253 + $0x438] sm:$0xff] %v1172
        %1301 = vst [vmem:[%s253 + $0x440] sm:$0xff] %v1173
        %1302 = vst [vmem:[%s253 + $0x448] sm:$0xff] %v1174
        %1303 = vst [vmem:[%s253 + $0x450] sm:$0xff] %v1175
        %1304 = vst [vmem:[%s253 + $0x458] sm:$0xff] %v1176
        %1305 = vst [vmem:[%s253 + $0x470] sm:$0xff] %v1177
        %1306 = vst [vmem:[%s253 + $0x478] sm:$0xff] %v1178
        %1307 = vst [vmem:[%s253 + $0x480] sm:$0xff] %v1179
        %1308 = vst [vmem:[%s253 + $0x488] sm:$0xff] %v1180
        %1309 = vst [vmem:[%s253 + $0x490] sm:$0xff] %v1181
        %1310 = vst [vmem:[%s253 + $0x498] sm:$0xff] %v1182
        %1311 = vst [vmem:[%s253 + $0x4a0] sm:$0xff] %v1183
        %1312 = vst [vmem:[%s253 + $0x4a8] sm:$0xff] %v1184
        %1313 = vst [vmem:[%s253 + $0x4c0] sm:$0xff] %v1185
        %1314 = vst [vmem:[%s253 + $0x4c8] sm:$0xff] %v1186
        %1315 = vst [vmem:[%s253 + $0x4d0] sm:$0xff] %v1187
        %1316 = vst [vmem:[%s253 + $0x4d8] sm:$0xff] %v1188
        %1317 = vst [vmem:[%s253 + $0x4e0] sm:$0xff] %v1189
        %1318 = vst [vmem:[%s253 + $0x4e8] sm:$0xff] %v1190
        %1319 = vst [vmem:[%s253 + $0x4f0] sm:$0xff] %v1191
        %1320 = vst [vmem:[%s253 + $0x4f8] sm:$0xff] %v1192
        %s1321 = sand.u32 %s158, 1
        %s1322 = scalar_lea.sflag [#allocation3], %s1321
        %s1323 = sand.u32 %s158, 1
        %s1324 = smul.addr %s1323, 1280
        %s1325 = scalar_lea.vmem [#allocation2], %s1324
        // Predicated region
        $region41: #{aspp_forward.1} parent=39 // pred_check
          %p1326 = pneg %p168
        $region42: #{aspp_forward.1} parent=39 // pred_check_branch
          %1328 = sbr.rel (%p1326) target = $region44
        $region43: #{aspp_forward.1} parent=39 // pred_region
          %s1329 = smul.u32 16, %s24
          %1331 = vsyncadd %s1322, 0
          %s1332 = smul.addr %s1329, 10
          %s1333 = smul.addr %s23, 320
          %s1334 = sadd.s32 %s1332, %s1333
          %s1335 = smul.addr %s1334, 8
          %s1336 = scalar_lea.hbm %s5, %s1335
          %s1337 = sshll.u32 %s1325, 4
          %s1338 = int_to_ptr.vmem [resolvable:$true] %s1337
          %s1339 = sshll.u32 %s1336, 4
          %s1340 = int_to_ptr.hbm [resolvable:$true] %s1339
          %1345 = dma.vmem_to_hbm [thread:$0]  %s1338, 20480, %s1340, %s1322, 1280, 1280, 80
        $region44: #{aspp_forward.1} parent=39 // pred_fallthru
          _
      $region40: #{aspp_forward.1} parent=5 // pred_fallthru
        _
      %p1346 = scmp.le.s32.totalorder 2, %s14
      // Predicated region
      $region45: #{aspp_forward.1} parent=5 // pred_check
        %p1347 = pneg %p1346
      $region46: #{aspp_forward.1} parent=5 // pred_check_branch
        %1349 = sbr.rel (%p1347) target = $region48
      $region47: #{aspp_forward.1} parent=5 // pred_region
        %s1350 = ssub.s32 %s14, 2
        // Predicated region
        $region49: #{aspp_forward.1} parent=47 // pred_check
          %p1351 = pneg %p174
        $region50: #{aspp_forward.1} parent=47 // pred_check_branch
          %1353 = sbr.rel (%p1351) target = $region52
        $region51: #{aspp_forward.1} parent=47 // pred_region
          %s1354 = sand.u32 %s159, 1
          %s1355 = scalar_lea.sflag [#allocation3], %s1354
          %s1356 = sand.u32 %s159, 1
          %s1357 = smul.addr %s1356, 1280
          %s1358 = scalar_lea.vmem [#allocation2], %s1357
          %1360 = dma.done %s1355, 20480
        $region52: #{aspp_forward.1} parent=47 // pred_fallthru
          _
      $region48: #{aspp_forward.1} parent=5 // pred_fallthru
        _
    $region6: #{aspp_forward.1} parent=1 // loop_footer
      %s18 = sadd.s32 1, %s14
    $region7: #{aspp_forward.1} parent=1 // loop_footer_branch
      %13 = sbr.rel target = $region3
    $region8: #{aspp_forward.1} parent=1 // loop_exit
      _
    %1361 = vsyncpa [#allocation3], 1
    %s1362 = scalar_lea.sflag [#allocation3], 1
    %1363 = vsyncpa %s1362, 1

</llo_original>
